<compile_context>
chip_gen: v7x
topology: tpu7x:2x2x1
jax: 0.10.0
libtpu: 0.0.40
codegen_flags: <defaults>
</compile_context>

<pallas_src>
import numpy as np
import jax
import jax.numpy as jnp
from jax.experimental import pallas as pl
from jax.experimental.pallas import tpu as pltpu

DOT_DTYPE = jnp.bfloat16   # MXU operand dtype; accumulation / epilogue stay f32.

# LeNet / CIFAR-10 geometry (fixed by the 16*5*5 flatten in the reference model).
K = 5
W1, C1, OC1 = 32, 3, 6            # conv1 over 32x32x3
W2, C2, OC2 = 14, 6, 16           # conv2 over 14x14x6 (after pool)
OW1, OW2 = W1 - K + 1, W2 - K + 1  # 28, 10
HALF1 = (OW1 // 2) * OC1           # 84  pooled-conv1 lanes per row (w, c)
HALF2 = (OW2 // 2) * OC2           # 80  pooled-conv2 lanes per row (w, c)
NPAD = 256                         # padded banded-weight lane width


# ---------------- fused kernel ----------------

def _make_fused_kernel(BI):
    LE1 = BI * 16 - 2      # rows of the folded-batch pooled-conv1 block
    LE2 = BI * 8 - 3       # rows of the folded-batch pooled-conv2 block

    def kernel(x_ref, w1_ref, b1_ref, w2_ref, b2_ref,
               fw1_ref, fb1_ref, fw2_ref, fb2_ref, fw3_ref, fb3_ref,
               o_ref, s1_ref, s2_ref):
        # ---- conv1 + bias + ReLU + 2x2/2 max-pool (all BI images at once) ----
        # x_ref is [BI*32, 96]; image b occupies rows [b*32, b*32+32).
        acc_e = acc_o = None
        for i in range(K):                               # static unroll, K == 5
            w_i = w1_ref[i]                              # [96, 256] bf16
            x_e = x_ref[pl.ds(i,     LE1, stride=2), :].astype(DOT_DTYPE)
            x_o = x_ref[pl.ds(i + 1, LE1, stride=2), :].astype(DOT_DTYPE)
            d_e = jnp.dot(x_e, w_i, preferred_element_type=jnp.float32)
            d_o = jnp.dot(x_o, w_i, preferred_element_type=jnp.float32)
            acc_e = d_e if acc_e is None else acc_e + d_e
            acc_o = d_o if acc_o is None else acc_o + d_o
        r1 = jnp.maximum(jnp.maximum(acc_e, acc_o) + b1_ref[...], 0.0)
        # width-phase pool: even-w cols in lanes [0,HALF1), odd-w at [128,128+HALF1).
        s1_ref[pl.ds(0, LE1), :] = jnp.maximum(r1[:, :HALF1], r1[:, 128:128 + HALF1])

        # ---- conv2 + bias + ReLU + 2x2/2 max-pool ----
        # s1 row b*16 + h holds image b's pooled-conv1 row h (h = 0..13), 84 lanes.
        acc_e = acc_o = None
        for i in range(K):
            w_i = w2_ref[i]                              # [84, 256] bf16
            x_e = s1_ref[pl.ds(i,     LE2, stride=2), :].astype(DOT_DTYPE)
            x_o = s1_ref[pl.ds(i + 1, LE2, stride=2), :].astype(DOT_DTYPE)
            d_e = jnp.dot(x_e, w_i, preferred_element_type=jnp.float32)
            d_o = jnp.dot(x_o, w_i, preferred_element_type=jnp.float32)
            acc_e = d_e if acc_e is None else acc_e + d_e
            acc_o = d_o if acc_o is None else acc_o + d_o
        r2 = jnp.maximum(jnp.maximum(acc_e, acc_o) + b2_ref[...], 0.0)
        s2_ref[pl.ds(0, LE2), :] = jnp.maximum(r2[:, :HALF2], r2[:, 128:128 + HALF2])

        # ---- fc1 -> ReLU -> fc2 -> ReLU -> fc3 (weights VMEM-resident) ----
        # s2 row b*8 + h holds image b's pooled-conv2 row h (h = 0..4), 80 lanes.
        # fc1 is accumulated per row h, so no [5,80] -> [400] reshape is needed.
        h1 = None
        for h in range(5):
            xh = s2_ref[pl.ds(h, BI, stride=8), :].astype(DOT_DTYPE)   # [BI, 80]
            d = jnp.dot(xh, fw1_ref[h], preferred_element_type=jnp.float32)
            h1 = d if h1 is None else h1 + d
        h1 = jnp.maximum(h1 + fb1_ref[...], 0.0)                       # [BI, 120]
        h2 = jnp.maximum(
            jnp.dot(h1.astype(DOT_DTYPE), fw2_ref[...],
                    preferred_element_type=jnp.float32) + fb2_ref[...], 0.0)
        o_ref[...] = jnp.dot(h2.astype(DOT_DTYPE), fw3_ref[...],
                             preferred_element_type=jnp.float32) + fb3_ref[...]

    return kernel


def lenet_fused(x_rows, p, *, BI):
    """x_rows: [Np*32, 96] f32 (Np a multiple of BI) -> logits [Np, 10] f32."""
    rows = x_rows.shape[0]
    Np = rows // 32
    assert rows == Np * 32 and Np % BI == 0

    def resident(arr):
        zeros = (0,) * arr.ndim
        return pl.BlockSpec(arr.shape, lambda n, _z=zeros: _z)

    return pl.pallas_call(
        _make_fused_kernel(BI),
        out_shape=jax.ShapeDtypeStruct((Np, 10), jnp.float32),
        grid=(Np // BI,),
        in_specs=[
            pl.BlockSpec((BI * 32, 96), lambda n: (n, 0)),   # one block of BI images
            resident(p["cw1"]), resident(p["cb1"]),
            resident(p["cw2"]), resident(p["cb2"]),
            resident(p["fw1"]), resident(p["fb1"]),
            resident(p["fw2"]), resident(p["fb2"]),
            resident(p["fw3"]), resident(p["fb3"]),
        ],
        out_specs=pl.BlockSpec((BI, 10), lambda n: (n, 0)),
        scratch_shapes=[
            pltpu.VMEM((BI * 16, HALF1), jnp.float32),   # pooled conv1 (per block)
            pltpu.VMEM((BI * 8, HALF2), jnp.float32),    # pooled conv2 (per block)
        ],
        compiler_params=pltpu.CompilerParams(dimension_semantics=("parallel",)),
    )(x_rows, p["cw1"], p["cb1"], p["cw2"], p["cb2"],
      p["fw1"], p["fb1"], p["fw2"], p["fb2"], p["fw3"], p["fb3"])


def net_forward(x_nchw, p, *, block_images=16):
    """Matches Net.forward: x [N, 3, 32, 32] -> logits [N, 10]."""
    N = x_nchw.shape[0]
    BI = min(block_images, N)
    Np = ((N + BI - 1) // BI) * BI
    # NCHW -> NHWC; flatten (W, C) into lanes (reshapes after the transpose are free).
    # TODO(synk): accept NHWC directly to drop this one small XLA transpose.
    x = jnp.transpose(x_nchw, (0, 2, 3, 1)).reshape(N, 32, W1 * C1)
    if Np != N:
        x = jnp.concatenate([x, jnp.zeros((Np - N, 32, W1 * C1), x.dtype)], axis=0)
    out = lenet_fused(x.reshape(Np * 32, W1 * C1), p, BI=BI)
    return out if Np == N else out[:N]


# ---------------- one-time weight preparation ----------------

def _banded_conv_weight(w, w_in):
    """Torch conv weight [OC, IC, K, K] -> banded matmul weight [K, w_in*IC, NPAD].

    Row index = w_pos*IC + ic (matching a [W, C]-flattened image row).  Output
    column (w_out, oc) lives at lane (w_out//2)*OC + oc, offset 0 for even w_out
    and offset 128 for odd w_out, so the pool's width phase is a max of two
    vreg-aligned lane slices.
    """
    w = np.asarray(w, np.float32)
    OC, IC, kh, kw = w.shape
    assert kh == kw == K
    ow = w_in - K + 1
    half = (ow // 2) * OC
    assert ow % 2 == 0 and half <= 128 and 128 + half <= NPAD
    band = np.zeros((K, w_in * IC, NPAD), np.float32)
    for i in range(K):
        for wo in range(ow):
            col0 = (wo % 2) * 128 + (wo // 2) * OC
            for j in range(K):
                wi = wo + j
                band[i, wi * IC:(wi + 1) * IC, col0:col0 + OC] = w[:, :, i, j].T
    return band


def _padded_bias(b, ow, oc):
    half = (ow // 2) * oc
    row = np.zeros((1, NPAD), np.float32)
    t = np.tile(np.asarray(b, np.float32), ow // 2)
    row[0, :half] = t
    row[0, 128:128 + half] = t
    return row


def init_params(key):
    ks = jax.random.split(key, 10)

    def u(k, shape, fan_in):
        bound = 1.0 / float(np.sqrt(fan_in))
        return jax.random.uniform(k, shape, jnp.float32, -bound, bound)

    return {
        "cw1": u(ks[0], (6, 3, 5, 5), 75),    "cb1": u(ks[1], (6,), 75),
        "cw2": u(ks[2], (16, 6, 5, 5), 150),  "cb2": u(ks[3], (16,), 150),
        "fw1": u(ks[4], (400, 120), 400),     "fb1": u(ks[5], (120,), 400),
        "fw2": u(ks[6], (120, 84), 120),      "fb2": u(ks[7], (84,), 120),
        "fw3": u(ks[8], (84, 10), 84),        "fb3": u(ks[9], (10,), 84),
    }


def prepare_params(p):
    """One-time repack of weights into kernel layouts (outside jit)."""
    # Fold PyTorch's (C,H,W) flatten order into fc1's rows; kernel emits (H,W,C).
    idx = np.arange(16 * 5 * 5).reshape(16, 5, 5)        # torch row id for (c, h, w)
    perm = np.transpose(idx, (1, 2, 0)).reshape(-1)      # (h, w, c) order -> torch row
    fw1 = np.asarray(p["fw1"], np.float32)[perm, :].reshape(5, HALF2, 120)
    return {
        "cw1": jnp.asarray(_banded_conv_weight(p["cw1"], W1), DOT_DTYPE),
        "cb1": jnp.asarray(_padded_bias(p["cb1"], OW1, OC1)),
        "cw2": jnp.asarray(_banded_conv_weight(p["cw2"], W2), DOT_DTYPE),
        "cb2": jnp.asarray(_padded_bias(p["cb2"], OW2, OC2)),
        "fw1": jnp.asarray(fw1, DOT_DTYPE),
        "fb1": jnp.asarray(p["fb1"], jnp.float32).reshape(1, -1),
        "fw2": jnp.asarray(p["fw2"], DOT_DTYPE),
        "fb2": jnp.asarray(p["fb2"], jnp.float32).reshape(1, -1),
        "fw3": jnp.asarray(p["fw3"], DOT_DTYPE),
        "fb3": jnp.asarray(p["fb3"], jnp.float32).reshape(1, -1),
    }


# ---------------- pure-JAX f32 reference (for the self-check) ----------------

def net_reference(x_nchw, raw):
    def conv(x, w, b):
        y = jax.lax.conv_general_dilated(
            x, jnp.asarray(w), (1, 1), "VALID",
            dimension_numbers=("NCHW", "OIHW", "NCHW"))
        return jax.nn.relu(y + jnp.asarray(b)[None, :, None, None])

    def pool(x):
        return jax.lax.reduce_window(x, -jnp.inf, jax.lax.max,
                                     (1, 1, 2, 2), (1, 1, 2, 2), "VALID")

    x = pool(conv(x_nchw, raw["cw1"], raw["cb1"]))
    x = pool(conv(x, raw["cw2"], raw["cb2"]))
    x = x.reshape(x.shape[0], -1)                      # (C, H, W) flatten
    x = jax.nn.relu(x @ raw["fw1"] + raw["fb1"])
    x = jax.nn.relu(x @ raw["fw2"] + raw["fb2"])
    return x @ raw["fw3"] + raw["fb3"]


if __name__ == "__main__":
    key = jax.random.PRNGKey(0)
    k_in, k_par = jax.random.split(key)
    # CIFAR-10 geometry is required by the 16*5*5 flatten -> 3x32x32 input.
    x = jax.random.normal(k_in, (2, 3, 32, 32), dtype=jnp.float32)
    raw = init_params(k_par)
    params = prepare_params(raw)

    out = jax.block_until_ready(jax.jit(net_forward)(x, params))
    assert out.shape == (2, 10) and out.dtype == jnp.float32

    # Loose self-check vs. an f32 XLA reference (kernel matmuls run in bf16).
    ref = jax.block_until_ready(net_reference(x, raw))
    err = float(jnp.max(jnp.abs(out - ref)))
    assert err < 0.05, f"max abs diff vs reference too large: {err}"
    print("KERNEL_OK")
</pallas_src>

<mosaic_0001>
module attributes {stable_mosaic.version = 11 : i64} {
  func.func @kernel(%arg0: i32, %arg1: memref<64x96xf32, #tpu.memory_space<vmem>>, %arg2: memref<5x96x256xbf16, #tpu.memory_space<vmem>>, %arg3: memref<1x256xf32, #tpu.memory_space<vmem>>, %arg4: memref<5x84x256xbf16, #tpu.memory_space<vmem>>, %arg5: memref<1x256xf32, #tpu.memory_space<vmem>>, %arg6: memref<5x80x120xbf16, #tpu.memory_space<vmem>>, %arg7: memref<1x120xf32, #tpu.memory_space<vmem>>, %arg8: memref<120x84xbf16, #tpu.memory_space<vmem>>, %arg9: memref<1x84xf32, #tpu.memory_space<vmem>>, %arg10: memref<84x10xbf16, #tpu.memory_space<vmem>>, %arg11: memref<1x10xf32, #tpu.memory_space<vmem>>, %arg12: memref<2x10xf32, #tpu.memory_space<vmem>>, %arg13: memref<32x84xf32, #tpu.memory_space<vmem>>, %arg14: memref<16x80xf32, #tpu.memory_space<vmem>>) attributes {dimension_semantics = [#tpu.dimension_semantics<parallel>], iteration_bounds = array<i64: 1>, scalar_prefetch = 0 : i64, scratch_operands = 2 : i64, tpu.core_type = #tpu.core_type<tc>, window_params = [{transform_indices = @transform_0, window_bounds = array<i64: 64, 96>}, {pipeline_mode = #tpu.pipeline_mode<synchronous>, transform_indices = @transform_1, window_bounds = array<i64: 5, 96, 256>}, {pipeline_mode = #tpu.pipeline_mode<synchronous>, transform_indices = @transform_2, window_bounds = array<i64: 1, 256>}, {pipeline_mode = #tpu.pipeline_mode<synchronous>, transform_indices = @transform_3, window_bounds = array<i64: 5, 84, 256>}, {pipeline_mode = #tpu.pipeline_mode<synchronous>, transform_indices = @transform_4, window_bounds = array<i64: 1, 256>}, {pipeline_mode = #tpu.pipeline_mode<synchronous>, transform_indices = @transform_5, window_bounds = array<i64: 5, 80, 120>}, {pipeline_mode = #tpu.pipeline_mode<synchronous>, transform_indices = @transform_6, window_bounds = array<i64: 1, 120>}, {pipeline_mode = #tpu.pipeline_mode<synchronous>, transform_indices = @transform_7, window_bounds = array<i64: 120, 84>}, {pipeline_mode = #tpu.pipeline_mode<synchronous>, transform_indices = @transform_8, window_bounds = array<i64: 1, 84>}, {pipeline_mode = #tpu.pipeline_mode<synchronous>, transform_indices = @transform_9, window_bounds = array<i64: 84, 10>}, {pipeline_mode = #tpu.pipeline_mode<synchronous>, transform_indices = @transform_10, window_bounds = array<i64: 1, 10>}, {transform_indices = @transform_11, window_bounds = array<i64: 2, 10>}]} {
    %c0 = arith.constant 0 : index
    %c0_0 = arith.constant 0 : index
    %c0_1 = arith.constant 0 : index
    %0 = vector.load %arg2[%c0, %c0_0, %c0_1] : memref<5x96x256xbf16, #tpu.memory_space<vmem>>, vector<1x96x256xbf16>
    %1 = vector.shape_cast %0 : vector<1x96x256xbf16> to vector<96x256xbf16>
    %c0_2 = arith.constant 0 : index
    %c0_3 = arith.constant 0 : index
    %2 = tpu.strided_load %arg1[%c0_2, %c0_3] {strides = array<i32: 2, 1>} : memref<64x96xf32, #tpu.memory_space<vmem>>, vector<30x96xf32>
    %3 = arith.truncf %2 : vector<30x96xf32> to vector<30x96xbf16>
    %c1 = arith.constant 1 : index
    %c0_4 = arith.constant 0 : index
    %4 = tpu.strided_load %arg1[%c1, %c0_4] {strides = array<i32: 2, 1>} : memref<64x96xf32, #tpu.memory_space<vmem>>, vector<30x96xf32>
    %5 = arith.truncf %4 : vector<30x96xf32> to vector<30x96xbf16>
    %cst = arith.constant dense<0.000000e+00> : vector<30x256xf32>
    %6 = tpu.matmul %3, %1, %cst {dimension_numbers = #tpu.dot_dimension_numbers<[1], [0], [0], [1], [0, 0, 1, 1], [], []>} : vector<30x96xbf16>, vector<96x256xbf16>, vector<30x256xf32> -> vector<30x256xf32>
    %cst_5 = arith.constant dense<0.000000e+00> : vector<30x256xf32>
    %7 = tpu.matmul %5, %1, %cst_5 {dimension_numbers = #tpu.dot_dimension_numbers<[1], [0], [0], [1], [0, 0, 1, 1], [], []>} : vector<30x96xbf16>, vector<96x256xbf16>, vector<30x256xf32> -> vector<30x256xf32>
    %c1_6 = arith.constant 1 : index
    %c0_7 = arith.constant 0 : index
    %c0_8 = arith.constant 0 : index
    %8 = vector.load %arg2[%c1_6, %c0_7, %c0_8] : memref<5x96x256xbf16, #tpu.memory_space<vmem>>, vector<1x96x256xbf16>
    %9 = vector.shape_cast %8 : vector<1x96x256xbf16> to vector<96x256xbf16>
    %c1_9 = arith.constant 1 : index
    %c0_10 = arith.constant 0 : index
    %10 = tpu.strided_load %arg1[%c1_9, %c0_10] {strides = array<i32: 2, 1>} : memref<64x96xf32, #tpu.memory_space<vmem>>, vector<30x96xf32>
    %11 = arith.truncf %10 : vector<30x96xf32> to vector<30x96xbf16>
    %c2 = arith.constant 2 : index
    %c0_11 = arith.constant 0 : index
    %12 = tpu.strided_load %arg1[%c2, %c0_11] {strides = array<i32: 2, 1>} : memref<64x96xf32, #tpu.memory_space<vmem>>, vector<30x96xf32>
    %13 = arith.truncf %12 : vector<30x96xf32> to vector<30x96xbf16>
    %cst_12 = arith.constant dense<0.000000e+00> : vector<30x256xf32>
    %14 = tpu.matmul %11, %9, %cst_12 {dimension_numbers = #tpu.dot_dimension_numbers<[1], [0], [0], [1], [0, 0, 1, 1], [], []>} : vector<30x96xbf16>, vector<96x256xbf16>, vector<30x256xf32> -> vector<30x256xf32>
    %cst_13 = arith.constant dense<0.000000e+00> : vector<30x256xf32>
    %15 = tpu.matmul %13, %9, %cst_13 {dimension_numbers = #tpu.dot_dimension_numbers<[1], [0], [0], [1], [0, 0, 1, 1], [], []>} : vector<30x96xbf16>, vector<96x256xbf16>, vector<30x256xf32> -> vector<30x256xf32>
    %16 = arith.addf %6, %14 : vector<30x256xf32>
    %17 = arith.addf %7, %15 : vector<30x256xf32>
    %c2_14 = arith.constant 2 : index
    %c0_15 = arith.constant 0 : index
    %c0_16 = arith.constant 0 : index
    %18 = vector.load %arg2[%c2_14, %c0_15, %c0_16] : memref<5x96x256xbf16, #tpu.memory_space<vmem>>, vector<1x96x256xbf16>
    %19 = vector.shape_cast %18 : vector<1x96x256xbf16> to vector<96x256xbf16>
    %c2_17 = arith.constant 2 : index
    %c0_18 = arith.constant 0 : index
    %20 = tpu.strided_load %arg1[%c2_17, %c0_18] {strides = array<i32: 2, 1>} : memref<64x96xf32, #tpu.memory_space<vmem>>, vector<30x96xf32>
    %21 = arith.truncf %20 : vector<30x96xf32> to vector<30x96xbf16>
    %c3 = arith.constant 3 : index
    %c0_19 = arith.constant 0 : index
    %22 = tpu.strided_load %arg1[%c3, %c0_19] {strides = array<i32: 2, 1>} : memref<64x96xf32, #tpu.memory_space<vmem>>, vector<30x96xf32>
    %23 = arith.truncf %22 : vector<30x96xf32> to vector<30x96xbf16>
    %cst_20 = arith.constant dense<0.000000e+00> : vector<30x256xf32>
    %24 = tpu.matmul %21, %19, %cst_20 {dimension_numbers = #tpu.dot_dimension_numbers<[1], [0], [0], [1], [0, 0, 1, 1], [], []>} : vector<30x96xbf16>, vector<96x256xbf16>, vector<30x256xf32> -> vector<30x256xf32>
    %cst_21 = arith.constant dense<0.000000e+00> : vector<30x256xf32>
    %25 = tpu.matmul %23, %19, %cst_21 {dimension_numbers = #tpu.dot_dimension_numbers<[1], [0], [0], [1], [0, 0, 1, 1], [], []>} : vector<30x96xbf16>, vector<96x256xbf16>, vector<30x256xf32> -> vector<30x256xf32>
    %26 = arith.addf %16, %24 : vector<30x256xf32>
    %27 = arith.addf %17, %25 : vector<30x256xf32>
    %c3_22 = arith.constant 3 : index
    %c0_23 = arith.constant 0 : index
    %c0_24 = arith.constant 0 : index
    %28 = vector.load %arg2[%c3_22, %c0_23, %c0_24] : memref<5x96x256xbf16, #tpu.memory_space<vmem>>, vector<1x96x256xbf16>
    %29 = vector.shape_cast %28 : vector<1x96x256xbf16> to vector<96x256xbf16>
    %c3_25 = arith.constant 3 : index
    %c0_26 = arith.constant 0 : index
    %30 = tpu.strided_load %arg1[%c3_25, %c0_26] {strides = array<i32: 2, 1>} : memref<64x96xf32, #tpu.memory_space<vmem>>, vector<30x96xf32>
    %31 = arith.truncf %30 : vector<30x96xf32> to vector<30x96xbf16>
    %c4 = arith.constant 4 : index
    %c0_27 = arith.constant 0 : index
    %32 = tpu.strided_load %arg1[%c4, %c0_27] {strides = array<i32: 2, 1>} : memref<64x96xf32, #tpu.memory_space<vmem>>, vector<30x96xf32>
    %33 = arith.truncf %32 : vector<30x96xf32> to vector<30x96xbf16>
    %cst_28 = arith.constant dense<0.000000e+00> : vector<30x256xf32>
    %34 = tpu.matmul %31, %29, %cst_28 {dimension_numbers = #tpu.dot_dimension_numbers<[1], [0], [0], [1], [0, 0, 1, 1], [], []>} : vector<30x96xbf16>, vector<96x256xbf16>, vector<30x256xf32> -> vector<30x256xf32>
    %cst_29 = arith.constant dense<0.000000e+00> : vector<30x256xf32>
    %35 = tpu.matmul %33, %29, %cst_29 {dimension_numbers = #tpu.dot_dimension_numbers<[1], [0], [0], [1], [0, 0, 1, 1], [], []>} : vector<30x96xbf16>, vector<96x256xbf16>, vector<30x256xf32> -> vector<30x256xf32>
    %36 = arith.addf %26, %34 : vector<30x256xf32>
    %37 = arith.addf %27, %35 : vector<30x256xf32>
    %c4_30 = arith.constant 4 : index
    %c0_31 = arith.constant 0 : index
    %c0_32 = arith.constant 0 : index
    %38 = vector.load %arg2[%c4_30, %c0_31, %c0_32] : memref<5x96x256xbf16, #tpu.memory_space<vmem>>, vector<1x96x256xbf16>
    %39 = vector.shape_cast %38 : vector<1x96x256xbf16> to vector<96x256xbf16>
    %c4_33 = arith.constant 4 : index
    %c0_34 = arith.constant 0 : index
    %40 = tpu.strided_load %arg1[%c4_33, %c0_34] {strides = array<i32: 2, 1>} : memref<64x96xf32, #tpu.memory_space<vmem>>, vector<30x96xf32>
    %41 = arith.truncf %40 : vector<30x96xf32> to vector<30x96xbf16>
    %c5 = arith.constant 5 : index
    %c0_35 = arith.constant 0 : index
    %42 = tpu.strided_load %arg1[%c5, %c0_35] {strides = array<i32: 2, 1>} : memref<64x96xf32, #tpu.memory_space<vmem>>, vector<30x96xf32>
    %43 = arith.truncf %42 : vector<30x96xf32> to vector<30x96xbf16>
    %cst_36 = arith.constant dense<0.000000e+00> : vector<30x256xf32>
    %44 = tpu.matmul %41, %39, %cst_36 {dimension_numbers = #tpu.dot_dimension_numbers<[1], [0], [0], [1], [0, 0, 1, 1], [], []>} : vector<30x96xbf16>, vector<96x256xbf16>, vector<30x256xf32> -> vector<30x256xf32>
    %cst_37 = arith.constant dense<0.000000e+00> : vector<30x256xf32>
    %45 = tpu.matmul %43, %39, %cst_37 {dimension_numbers = #tpu.dot_dimension_numbers<[1], [0], [0], [1], [0, 0, 1, 1], [], []>} : vector<30x96xbf16>, vector<96x256xbf16>, vector<30x256xf32> -> vector<30x256xf32>
    %46 = arith.addf %36, %44 : vector<30x256xf32>
    %47 = arith.addf %37, %45 : vector<30x256xf32>
    %48 = arith.maximumf %46, %47 : vector<30x256xf32>
    %c0_38 = arith.constant 0 : index
    %c0_39 = arith.constant 0 : index
    %49 = vector.load %arg3[%c0_38, %c0_39] : memref<1x256xf32, #tpu.memory_space<vmem>>, vector<1x256xf32>
    %50 = vector.broadcast %49 : vector<1x256xf32> to vector<30x256xf32>
    %51 = arith.addf %48, %50 : vector<30x256xf32>
    %cst_40 = arith.constant 0.000000e+00 : f32
    %52 = vector.broadcast %cst_40 : f32 to vector<30x256xf32>
    %53 = arith.maximumf %51, %52 : vector<30x256xf32>
    %54 = vector.extract_strided_slice %53 {offsets = [0, 0], sizes = [30, 84], strides = [1, 1]} : vector<30x256xf32> to vector<30x84xf32>
    %55 = vector.extract_strided_slice %53 {offsets = [0, 128], sizes = [30, 84], strides = [1, 1]} : vector<30x256xf32> to vector<30x84xf32>
    %56 = arith.maximumf %54, %55 : vector<30x84xf32>
    %c0_41 = arith.constant 0 : index
    %c0_42 = arith.constant 0 : index
    %57 = vector.load %arg13[%c0_41, %c0_42] : memref<32x84xf32, #tpu.memory_space<vmem>>, vector<30x84xf32>
    tpu.vector_store %arg13[%c0_41, %c0_42], %56 {strides = array<i32>} : memref<32x84xf32, #tpu.memory_space<vmem>>, vector<30x84xf32>,
    %c0_43 = arith.constant 0 : index
    %c0_44 = arith.constant 0 : index
    %c0_45 = arith.constant 0 : index
    %58 = vector.load %arg4[%c0_43, %c0_44, %c0_45] : memref<5x84x256xbf16, #tpu.memory_space<vmem>>, vector<1x84x256xbf16>
    %59 = vector.shape_cast %58 : vector<1x84x256xbf16> to vector<84x256xbf16>
    %c0_46 = arith.constant 0 : index
    %c0_47 = arith.constant 0 : index
    %60 = tpu.strided_load %arg13[%c0_46, %c0_47] {strides = array<i32: 2, 1>} : memref<32x84xf32, #tpu.memory_space<vmem>>, vector<13x84xf32>
    %61 = arith.truncf %60 : vector<13x84xf32> to vector<13x84xbf16>
    %c1_48 = arith.constant 1 : index
    %c0_49 = arith.constant 0 : index
    %62 = tpu.strided_load %arg13[%c1_48, %c0_49] {strides = array<i32: 2, 1>} : memref<32x84xf32, #tpu.memory_space<vmem>>, vector<13x84xf32>
    %63 = arith.truncf %62 : vector<13x84xf32> to vector<13x84xbf16>
    %cst_50 = arith.constant dense<0.000000e+00> : vector<13x256xf32>
    %64 = tpu.matmul %61, %59, %cst_50 {dimension_numbers = #tpu.dot_dimension_numbers<[1], [0], [0], [1], [0, 0, 1, 1], [], []>} : vector<13x84xbf16>, vector<84x256xbf16>, vector<13x256xf32> -> vector<13x256xf32>
    %cst_51 = arith.constant dense<0.000000e+00> : vector<13x256xf32>
    %65 = tpu.matmul %63, %59, %cst_51 {dimension_numbers = #tpu.dot_dimension_numbers<[1], [0], [0], [1], [0, 0, 1, 1], [], []>} : vector<13x84xbf16>, vector<84x256xbf16>, vector<13x256xf32> -> vector<13x256xf32>
    %c1_52 = arith.constant 1 : index
    %c0_53 = arith.constant 0 : index
    %c0_54 = arith.constant 0 : index
    %66 = vector.load %arg4[%c1_52, %c0_53, %c0_54] : memref<5x84x256xbf16, #tpu.memory_space<vmem>>, vector<1x84x256xbf16>
    %67 = vector.shape_cast %66 : vector<1x84x256xbf16> to vector<84x256xbf16>
    %c1_55 = arith.constant 1 : index
    %c0_56 = arith.constant 0 : index
    %68 = tpu.strided_load %arg13[%c1_55, %c0_56] {strides = array<i32: 2, 1>} : memref<32x84xf32, #tpu.memory_space<vmem>>, vector<13x84xf32>
    %69 = arith.truncf %68 : vector<13x84xf32> to vector<13x84xbf16>
    %c2_57 = arith.constant 2 : index
    %c0_58 = arith.constant 0 : index
    %70 = tpu.strided_load %arg13[%c2_57, %c0_58] {strides = array<i32: 2, 1>} : memref<32x84xf32, #tpu.memory_space<vmem>>, vector<13x84xf32>
    %71 = arith.truncf %70 : vector<13x84xf32> to vector<13x84xbf16>
    %cst_59 = arith.constant dense<0.000000e+00> : vector<13x256xf32>
    %72 = tpu.matmul %69, %67, %cst_59 {dimension_numbers = #tpu.dot_dimension_numbers<[1], [0], [0], [1], [0, 0, 1, 1], [], []>} : vector<13x84xbf16>, vector<84x256xbf16>, vector<13x256xf32> -> vector<13x256xf32>
    %cst_60 = arith.constant dense<0.000000e+00> : vector<13x256xf32>
    %73 = tpu.matmul %71, %67, %cst_60 {dimension_numbers = #tpu.dot_dimension_numbers<[1], [0], [0], [1], [0, 0, 1, 1], [], []>} : vector<13x84xbf16>, vector<84x256xbf16>, vector<13x256xf32> -> vector<13x256xf32>
    %74 = arith.addf %64, %72 : vector<13x256xf32>
    %75 = arith.addf %65, %73 : vector<13x256xf32>
    %c2_61 = arith.constant 2 : index
    %c0_62 = arith.constant 0 : index
    %c0_63 = arith.constant 0 : index
    %76 = vector.load %arg4[%c2_61, %c0_62, %c0_63] : memref<5x84x256xbf16, #tpu.memory_space<vmem>>, vector<1x84x256xbf16>
    %77 = vector.shape_cast %76 : vector<1x84x256xbf16> to vector<84x256xbf16>
    %c2_64 = arith.constant 2 : index
    %c0_65 = arith.constant 0 : index
    %78 = tpu.strided_load %arg13[%c2_64, %c0_65] {strides = array<i32: 2, 1>} : memref<32x84xf32, #tpu.memory_space<vmem>>, vector<13x84xf32>
    %79 = arith.truncf %78 : vector<13x84xf32> to vector<13x84xbf16>
    %c3_66 = arith.constant 3 : index
    %c0_67 = arith.constant 0 : index
    %80 = tpu.strided_load %arg13[%c3_66, %c0_67] {strides = array<i32: 2, 1>} : memref<32x84xf32, #tpu.memory_space<vmem>>, vector<13x84xf32>
    %81 = arith.truncf %80 : vector<13x84xf32> to vector<13x84xbf16>
    %cst_68 = arith.constant dense<0.000000e+00> : vector<13x256xf32>
    %82 = tpu.matmul %79, %77, %cst_68 {dimension_numbers = #tpu.dot_dimension_numbers<[1], [0], [0], [1], [0, 0, 1, 1], [], []>} : vector<13x84xbf16>, vector<84x256xbf16>, vector<13x256xf32> -> vector<13x256xf32>
    %cst_69 = arith.constant dense<0.000000e+00> : vector<13x256xf32>
    %83 = tpu.matmul %81, %77, %cst_69 {dimension_numbers = #tpu.dot_dimension_numbers<[1], [0], [0], [1], [0, 0, 1, 1], [], []>} : vector<13x84xbf16>, vector<84x256xbf16>, vector<13x256xf32> -> vector<13x256xf32>
    %84 = arith.addf %74, %82 : vector<13x256xf32>
    %85 = arith.addf %75, %83 : vector<13x256xf32>
    %c3_70 = arith.constant 3 : index
    %c0_71 = arith.constant 0 : index
    %c0_72 = arith.constant 0 : index
    %86 = vector.load %arg4[%c3_70, %c0_71, %c0_72] : memref<5x84x256xbf16, #tpu.memory_space<vmem>>, vector<1x84x256xbf16>
    %87 = vector.shape_cast %86 : vector<1x84x256xbf16> to vector<84x256xbf16>
    %c3_73 = arith.constant 3 : index
    %c0_74 = arith.constant 0 : index
    %88 = tpu.strided_load %arg13[%c3_73, %c0_74] {strides = array<i32: 2, 1>} : memref<32x84xf32, #tpu.memory_space<vmem>>, vector<13x84xf32>
    %89 = arith.truncf %88 : vector<13x84xf32> to vector<13x84xbf16>
    %c4_75 = arith.constant 4 : index
    %c0_76 = arith.constant 0 : index
    %90 = tpu.strided_load %arg13[%c4_75, %c0_76] {strides = array<i32: 2, 1>} : memref<32x84xf32, #tpu.memory_space<vmem>>, vector<13x84xf32>
    %91 = arith.truncf %90 : vector<13x84xf32> to vector<13x84xbf16>
    %cst_77 = arith.constant dense<0.000000e+00> : vector<13x256xf32>
    %92 = tpu.matmul %89, %87, %cst_77 {dimension_numbers = #tpu.dot_dimension_numbers<[1], [0], [0], [1], [0, 0, 1, 1], [], []>} : vector<13x84xbf16>, vector<84x256xbf16>, vector<13x256xf32> -> vector<13x256xf32>
    %cst_78 = arith.constant dense<0.000000e+00> : vector<13x256xf32>
    %93 = tpu.matmul %91, %87, %cst_78 {dimension_numbers = #tpu.dot_dimension_numbers<[1], [0], [0], [1], [0, 0, 1, 1], [], []>} : vector<13x84xbf16>, vector<84x256xbf16>, vector<13x256xf32> -> vector<13x256xf32>
    %94 = arith.addf %84, %92 : vector<13x256xf32>
    %95 = arith.addf %85, %93 : vector<13x256xf32>
    %c4_79 = arith.constant 4 : index
    %c0_80 = arith.constant 0 : index
    %c0_81 = arith.constant 0 : index
    %96 = vector.load %arg4[%c4_79, %c0_80, %c0_81] : memref<5x84x256xbf16, #tpu.memory_space<vmem>>, vector<1x84x256xbf16>
    %97 = vector.shape_cast %96 : vector<1x84x256xbf16> to vector<84x256xbf16>
    %c4_82 = arith.constant 4 : index
    %c0_83 = arith.constant 0 : index
    %98 = tpu.strided_load %arg13[%c4_82, %c0_83] {strides = array<i32: 2, 1>} : memref<32x84xf32, #tpu.memory_space<vmem>>, vector<13x84xf32>
    %99 = arith.truncf %98 : vector<13x84xf32> to vector<13x84xbf16>
    %c5_84 = arith.constant 5 : index
    %c0_85 = arith.constant 0 : index
    %100 = tpu.strided_load %arg13[%c5_84, %c0_85] {strides = array<i32: 2, 1>} : memref<32x84xf32, #tpu.memory_space<vmem>>, vector<13x84xf32>
    %101 = arith.truncf %100 : vector<13x84xf32> to vector<13x84xbf16>
    %cst_86 = arith.constant dense<0.000000e+00> : vector<13x256xf32>
    %102 = tpu.matmul %99, %97, %cst_86 {dimension_numbers = #tpu.dot_dimension_numbers<[1], [0], [0], [1], [0, 0, 1, 1], [], []>} : vector<13x84xbf16>, vector<84x256xbf16>, vector<13x256xf32> -> vector<13x256xf32>
    %cst_87 = arith.constant dense<0.000000e+00> : vector<13x256xf32>
    %103 = tpu.matmul %101, %97, %cst_87 {dimension_numbers = #tpu.dot_dimension_numbers<[1], [0], [0], [1], [0, 0, 1, 1], [], []>} : vector<13x84xbf16>, vector<84x256xbf16>, vector<13x256xf32> -> vector<13x256xf32>
    %104 = arith.addf %94, %102 : vector<13x256xf32>
    %105 = arith.addf %95, %103 : vector<13x256xf32>
    %106 = arith.maximumf %104, %105 : vector<13x256xf32>
    %c0_88 = arith.constant 0 : index
    %c0_89 = arith.constant 0 : index
    %107 = vector.load %arg5[%c0_88, %c0_89] : memref<1x256xf32, #tpu.memory_space<vmem>>, vector<1x256xf32>
    %108 = vector.broadcast %107 : vector<1x256xf32> to vector<13x256xf32>
    %109 = arith.addf %106, %108 : vector<13x256xf32>
    %cst_90 = arith.constant 0.000000e+00 : f32
    %110 = vector.broadcast %cst_90 : f32 to vector<13x256xf32>
    %111 = arith.maximumf %109, %110 : vector<13x256xf32>
    %112 = vector.extract_strided_slice %111 {offsets = [0, 0], sizes = [13, 80], strides = [1, 1]} : vector<13x256xf32> to vector<13x80xf32>
    %113 = vector.extract_strided_slice %111 {offsets = [0, 128], sizes = [13, 80], strides = [1, 1]} : vector<13x256xf32> to vector<13x80xf32>
    %114 = arith.maximumf %112, %113 : vector<13x80xf32>
    %c0_91 = arith.constant 0 : index
    %c0_92 = arith.constant 0 : index
    %115 = vector.load %arg14[%c0_91, %c0_92] : memref<16x80xf32, #tpu.memory_space<vmem>>, vector<13x80xf32>
    tpu.vector_store %arg14[%c0_91, %c0_92], %114 {strides = array<i32>} : memref<16x80xf32, #tpu.memory_space<vmem>>, vector<13x80xf32>,
    %c0_93 = arith.constant 0 : index
    %c0_94 = arith.constant 0 : index
    %116 = tpu.strided_load %arg14[%c0_93, %c0_94] {strides = array<i32: 8, 1>} : memref<16x80xf32, #tpu.memory_space<vmem>>, vector<2x80xf32>
    %117 = arith.truncf %116 : vector<2x80xf32> to vector<2x80xbf16>
    %c0_95 = arith.constant 0 : index
    %c0_96 = arith.constant 0 : index
    %c0_97 = arith.constant 0 : index
    %118 = vector.load %arg6[%c0_95, %c0_96, %c0_97] : memref<5x80x120xbf16, #tpu.memory_space<vmem>>, vector<1x80x120xbf16>
    %119 = vector.shape_cast %118 : vector<1x80x120xbf16> to vector<80x120xbf16>
    %cst_98 = arith.constant dense<0.000000e+00> : vector<2x120xf32>
    %120 = tpu.matmul %117, %119, %cst_98 {dimension_numbers = #tpu.dot_dimension_numbers<[1], [0], [0], [1], [0, 0, 1, 1], [], []>} : vector<2x80xbf16>, vector<80x120xbf16>, vector<2x120xf32> -> vector<2x120xf32>
    %c1_99 = arith.constant 1 : index
    %c0_100 = arith.constant 0 : index
    %121 = tpu.strided_load %arg14[%c1_99, %c0_100] {strides = array<i32: 8, 1>} : memref<16x80xf32, #tpu.memory_space<vmem>>, vector<2x80xf32>
    %122 = arith.truncf %121 : vector<2x80xf32> to vector<2x80xbf16>
    %c1_101 = arith.constant 1 : index
    %c0_102 = arith.constant 0 : index
    %c0_103 = arith.constant 0 : index
    %123 = vector.load %arg6[%c1_101, %c0_102, %c0_103] : memref<5x80x120xbf16, #tpu.memory_space<vmem>>, vector<1x80x120xbf16>
    %124 = vector.shape_cast %123 : vector<1x80x120xbf16> to vector<80x120xbf16>
    %cst_104 = arith.constant dense<0.000000e+00> : vector<2x120xf32>
    %125 = tpu.matmul %122, %124, %cst_104 {dimension_numbers = #tpu.dot_dimension_numbers<[1], [0], [0], [1], [0, 0, 1, 1], [], []>} : vector<2x80xbf16>, vector<80x120xbf16>, vector<2x120xf32> -> vector<2x120xf32>
    %126 = arith.addf %120, %125 : vector<2x120xf32>
    %c2_105 = arith.constant 2 : index
    %c0_106 = arith.constant 0 : index
    %127 = tpu.strided_load %arg14[%c2_105, %c0_106] {strides = array<i32: 8, 1>} : memref<16x80xf32, #tpu.memory_space<vmem>>, vector<2x80xf32>
    %128 = arith.truncf %127 : vector<2x80xf32> to vector<2x80xbf16>
    %c2_107 = arith.constant 2 : index
    %c0_108 = arith.constant 0 : index
    %c0_109 = arith.constant 0 : index
    %129 = vector.load %arg6[%c2_107, %c0_108, %c0_109] : memref<5x80x120xbf16, #tpu.memory_space<vmem>>, vector<1x80x120xbf16>
    %130 = vector.shape_cast %129 : vector<1x80x120xbf16> to vector<80x120xbf16>
    %cst_110 = arith.constant dense<0.000000e+00> : vector<2x120xf32>
    %131 = tpu.matmul %128, %130, %cst_110 {dimension_numbers = #tpu.dot_dimension_numbers<[1], [0], [0], [1], [0, 0, 1, 1], [], []>} : vector<2x80xbf16>, vector<80x120xbf16>, vector<2x120xf32> -> vector<2x120xf32>
    %132 = arith.addf %126, %131 : vector<2x120xf32>
    %c3_111 = arith.constant 3 : index
    %c0_112 = arith.constant 0 : index
    %133 = tpu.strided_load %arg14[%c3_111, %c0_112] {strides = array<i32: 8, 1>} : memref<16x80xf32, #tpu.memory_space<vmem>>, vector<2x80xf32>
    %134 = arith.truncf %133 : vector<2x80xf32> to vector<2x80xbf16>
    %c3_113 = arith.constant 3 : index
    %c0_114 = arith.constant 0 : index
    %c0_115 = arith.constant 0 : index
    %135 = vector.load %arg6[%c3_113, %c0_114, %c0_115] : memref<5x80x120xbf16, #tpu.memory_space<vmem>>, vector<1x80x120xbf16>
    %136 = vector.shape_cast %135 : vector<1x80x120xbf16> to vector<80x120xbf16>
    %cst_116 = arith.constant dense<0.000000e+00> : vector<2x120xf32>
    %137 = tpu.matmul %134, %136, %cst_116 {dimension_numbers = #tpu.dot_dimension_numbers<[1], [0], [0], [1], [0, 0, 1, 1], [], []>} : vector<2x80xbf16>, vector<80x120xbf16>, vector<2x120xf32> -> vector<2x120xf32>
    %138 = arith.addf %132, %137 : vector<2x120xf32>
    %c4_117 = arith.constant 4 : index
    %c0_118 = arith.constant 0 : index
    %139 = tpu.strided_load %arg14[%c4_117, %c0_118] {strides = array<i32: 8, 1>} : memref<16x80xf32, #tpu.memory_space<vmem>>, vector<2x80xf32>
    %140 = arith.truncf %139 : vector<2x80xf32> to vector<2x80xbf16>
    %c4_119 = arith.constant 4 : index
    %c0_120 = arith.constant 0 : index
    %c0_121 = arith.constant 0 : index
    %141 = vector.load %arg6[%c4_119, %c0_120, %c0_121] : memref<5x80x120xbf16, #tpu.memory_space<vmem>>, vector<1x80x120xbf16>
    %142 = vector.shape_cast %141 : vector<1x80x120xbf16> to vector<80x120xbf16>
    %cst_122 = arith.constant dense<0.000000e+00> : vector<2x120xf32>
    %143 = tpu.matmul %140, %142, %cst_122 {dimension_numbers = #tpu.dot_dimension_numbers<[1], [0], [0], [1], [0, 0, 1, 1], [], []>} : vector<2x80xbf16>, vector<80x120xbf16>, vector<2x120xf32> -> vector<2x120xf32>
    %144 = arith.addf %138, %143 : vector<2x120xf32>
    %c0_123 = arith.constant 0 : index
    %c0_124 = arith.constant 0 : index
    %145 = vector.load %arg7[%c0_123, %c0_124] : memref<1x120xf32, #tpu.memory_space<vmem>>, vector<1x120xf32>
    %146 = vector.broadcast %145 : vector<1x120xf32> to vector<2x120xf32>
    %147 = arith.addf %144, %146 : vector<2x120xf32>
    %cst_125 = arith.constant 0.000000e+00 : f32
    %148 = vector.broadcast %cst_125 : f32 to vector<2x120xf32>
    %149 = arith.maximumf %147, %148 : vector<2x120xf32>
    %150 = arith.truncf %149 : vector<2x120xf32> to vector<2x120xbf16>
    %c0_126 = arith.constant 0 : index
    %c0_127 = arith.constant 0 : index
    %151 = vector.load %arg8[%c0_126, %c0_127] : memref<120x84xbf16, #tpu.memory_space<vmem>>, vector<120x84xbf16>
    %cst_128 = arith.constant dense<0.000000e+00> : vector<2x84xf32>
    %152 = tpu.matmul %150, %151, %cst_128 {dimension_numbers = #tpu.dot_dimension_numbers<[1], [0], [0], [1], [0, 0, 1, 1], [], []>} : vector<2x120xbf16>, vector<120x84xbf16>, vector<2x84xf32> -> vector<2x84xf32>
    %c0_129 = arith.constant 0 : index
    %c0_130 = arith.constant 0 : index
    %153 = vector.load %arg9[%c0_129, %c0_130] : memref<1x84xf32, #tpu.memory_space<vmem>>, vector<1x84xf32>
    %154 = vector.broadcast %153 : vector<1x84xf32> to vector<2x84xf32>
    %155 = arith.addf %152, %154 : vector<2x84xf32>
    %cst_131 = arith.constant 0.000000e+00 : f32
    %156 = vector.broadcast %cst_131 : f32 to vector<2x84xf32>
    %157 = arith.maximumf %155, %156 : vector<2x84xf32>
    %158 = arith.truncf %157 : vector<2x84xf32> to vector<2x84xbf16>
    %c0_132 = arith.constant 0 : index
    %c0_133 = arith.constant 0 : index
    %159 = vector.load %arg10[%c0_132, %c0_133] : memref<84x10xbf16, #tpu.memory_space<vmem>>, vector<84x10xbf16>
    %cst_134 = arith.constant dense<0.000000e+00> : vector<2x10xf32>
    %160 = tpu.matmul %158, %159, %cst_134 {dimension_numbers = #tpu.dot_dimension_numbers<[1], [0], [0], [1], [0, 0, 1, 1], [], []>} : vector<2x84xbf16>, vector<84x10xbf16>, vector<2x10xf32> -> vector<2x10xf32>
    %c0_135 = arith.constant 0 : index
    %c0_136 = arith.constant 0 : index
    %161 = vector.load %arg11[%c0_135, %c0_136] : memref<1x10xf32, #tpu.memory_space<vmem>>, vector<1x10xf32>
    %162 = vector.broadcast %161 : vector<1x10xf32> to vector<2x10xf32>
    %163 = arith.addf %160, %162 : vector<2x10xf32>
    %c0_137 = arith.constant 0 : index
    %c0_138 = arith.constant 0 : index
    %164 = vector.load %arg12[%c0_137, %c0_138] : memref<2x10xf32, #tpu.memory_space<vmem>>, vector<2x10xf32>
    tpu.vector_store %arg12[%c0_137, %c0_138], %163 {strides = array<i32>} : memref<2x10xf32, #tpu.memory_space<vmem>>, vector<2x10xf32>,
    return
  }
  func.func @transform_0(%arg0: i32) -> (i32, i32) {
    %c0_i32 = arith.constant 0 : i32
    %c0_i32_0 = arith.constant 0 : i32
    return %arg0, %c0_i32 : i32, i32
  }
  func.func @transform_1(%arg0: i32) -> (i32, i32, i32) {
    %c0_i32 = arith.constant 0 : i32
    %c0_i32_0 = arith.constant 0 : i32
    %c0_i32_1 = arith.constant 0 : i32
    %c0_i32_2 = arith.constant 0 : i32
    return %c0_i32, %c0_i32_0, %c0_i32_1 : i32, i32, i32
  }
  func.func @transform_2(%arg0: i32) -> (i32, i32) {
    %c0_i32 = arith.constant 0 : i32
    %c0_i32_0 = arith.constant 0 : i32
    %c0_i32_1 = arith.constant 0 : i32
    return %c0_i32, %c0_i32_0 : i32, i32
  }
  func.func @transform_3(%arg0: i32) -> (i32, i32, i32) {
    %c0_i32 = arith.constant 0 : i32
    %c0_i32_0 = arith.constant 0 : i32
    %c0_i32_1 = arith.constant 0 : i32
    %c0_i32_2 = arith.constant 0 : i32
    return %c0_i32, %c0_i32_0, %c0_i32_1 : i32, i32, i32
  }
  func.func @transform_4(%arg0: i32) -> (i32, i32) {
    %c0_i32 = arith.constant 0 : i32
    %c0_i32_0 = arith.constant 0 : i32
    %c0_i32_1 = arith.constant 0 : i32
    return %c0_i32, %c0_i32_0 : i32, i32
  }
  func.func @transform_5(%arg0: i32) -> (i32, i32, i32) {
    %c0_i32 = arith.constant 0 : i32
    %c0_i32_0 = arith.constant 0 : i32
    %c0_i32_1 = arith.constant 0 : i32
    %c0_i32_2 = arith.constant 0 : i32
    return %c0_i32, %c0_i32_0, %c0_i32_1 : i32, i32, i32
  }
  func.func @transform_6(%arg0: i32) -> (i32, i32) {
    %c0_i32 = arith.constant 0 : i32
    %c0_i32_0 = arith.constant 0 : i32
    %c0_i32_1 = arith.constant 0 : i32
    return %c0_i32, %c0_i32_0 : i32, i32
  }
  func.func @transform_7(%arg0: i32) -> (i32, i32) {
    %c0_i32 = arith.constant 0 : i32
    %c0_i32_0 = arith.constant 0 : i32
    %c0_i32_1 = arith.constant 0 : i32
    return %c0_i32, %c0_i32_0 : i32, i32
  }
  func.func @transform_8(%arg0: i32) -> (i32, i32) {
    %c0_i32 = arith.constant 0 : i32
    %c0_i32_0 = arith.constant 0 : i32
    %c0_i32_1 = arith.constant 0 : i32
    return %c0_i32, %c0_i32_0 : i32, i32
  }
  func.func @transform_9(%arg0: i32) -> (i32, i32) {
    %c0_i32 = arith.constant 0 : i32
    %c0_i32_0 = arith.constant 0 : i32
    %c0_i32_1 = arith.constant 0 : i32
    return %c0_i32, %c0_i32_0 : i32, i32
  }
  func.func @transform_10(%arg0: i32) -> (i32, i32) {
    %c0_i32 = arith.constant 0 : i32
    %c0_i32_0 = arith.constant 0 : i32
    %c0_i32_1 = arith.constant 0 : i32
    return %c0_i32, %c0_i32_0 : i32, i32
  }
  func.func @transform_11(%arg0: i32) -> (i32, i32) {
    %c0_i32 = arith.constant 0 : i32
    %c0_i32_0 = arith.constant 0 : i32
    return %arg0, %c0_i32 : i32, i32
  }
}

</mosaic_0001>

<llo_original>
// kernel: net_forward.1
$region0: #{net_forward.1}
  #allocation0 [shape = 'u32[]', space=smem, size = 0x4, offset = 0x4, fixed_abs, tag = 'smem constant byte address 0x4 - core index']
  #allocation1 [shape = 'u32[144,128]{1,0:T(1,128)}', space=vmem, size = 0x12000, scoped, tag = 'internal scratch']
  #allocation2 [shape = 'f32[32,84]{1,0:T(8,128)}', space=vmem, size = 0x4000, scoped, tag = 'scratch operand']
  #allocation3 [shape = 'f32[16,80]{1,0:T(8,128)}', space=vmem, size = 0x2000, scoped, tag = 'scratch operand']
  %s0 = inlined_call_operand.vmem [shape: f32[64,96], index: 0, kind: input, shape index: {}]
  %s1 = inlined_call_operand.vmem [shape: bf16[5,96,256], index: 1, kind: input, shape index: {}]
  %s2 = inlined_call_operand.vmem [shape: f32[1,256], index: 2, kind: input, shape index: {}]
  %s3 = inlined_call_operand.vmem [shape: bf16[5,84,256], index: 3, kind: input, shape index: {}]
  %s4 = inlined_call_operand.vmem [shape: f32[1,256], index: 4, kind: input, shape index: {}]
  %s5 = inlined_call_operand.hbm [shape: bf16[5,80,120], index: 5, kind: input, shape index: {}]
  %s6 = inlined_call_operand.vmem [shape: f32[1,120], index: 6, kind: input, shape index: {}]
  %s7 = inlined_call_operand.vmem [shape: bf16[120,84], index: 7, kind: input, shape index: {}]
  %s8 = inlined_call_operand.vmem [shape: f32[1,84], index: 8, kind: input, shape index: {}]
  %s9 = inlined_call_operand.vmem [shape: bf16[84,10], index: 9, kind: input, shape index: {}]
  %s10 = inlined_call_operand.vmem [shape: f32[1,10], index: 10, kind: input, shape index: {}]
  %s11 = inlined_call_operand.hbm [shape: f32[2,10], index: 11, kind: output, shape index: {}]
  %s12 = sld [smem:[#allocation0]]
  $region58: #{net_forward.1} parent=0
    _
  %s14 = ssub.s32 1, %s12
  %s15 = scalar_select 0, %s14, %s12
  $region1: #{net_forward.1} parent=0
    #allocation4 [shape = 'u8[102400]{0}', space=vmem, size = 0x19000, scoped, tag = 'input window, operand 5, single buffered']
    #allocation5 [shape = 's32[1]{0}', space=sflag, size = 0x4, scoped, tag = 'scoped memory for net_forward.1']
    #allocation6 [shape = 's32[1]{0}', space=sflag, size = 0x4, scoped, tag = 'scoped memory for net_forward.1']
    #allocation7 [shape = 'u8[1024]{0}', space=vmem, size = 0x400, scoped, tag = 'output window, operand 0, single buffered']
    %16 = vsyncpa [#allocation5], 0
    %17 = vsyncpa [#allocation6], 0
    // Predicated region
    $region2: #{net_forward.1} parent=1 // pred_check
      _
    $region3: #{net_forward.1} parent=1 // pred_check_branch
      %19 = sbr.rel (0) target = $region5
    $region4: #{net_forward.1} parent=1 // pred_region
      _
    $region5: #{net_forward.1} parent=1 // pred_fallthru
      _
    // Predicated region
    $region6: #{net_forward.1} parent=1 // pred_check
      _
    $region7: #{net_forward.1} parent=1 // pred_check_branch
      %21 = sbr.rel (0) target = $region9
    $region8: #{net_forward.1} parent=1 // pred_region
      _
    $region9: #{net_forward.1} parent=1 // pred_fallthru
      _
    // Predicated region
    $region10: #{net_forward.1} parent=1 // pred_check
      _
    $region11: #{net_forward.1} parent=1 // pred_check_branch
      %23 = sbr.rel (0) target = $region13
    $region12: #{net_forward.1} parent=1 // pred_region
      _
    $region13: #{net_forward.1} parent=1 // pred_fallthru
      _
    // Predicated region
    $region14: #{net_forward.1} parent=1 // pred_check
      _
    $region15: #{net_forward.1} parent=1 // pred_check_branch
      %25 = sbr.rel (0) target = $region17
    $region16: #{net_forward.1} parent=1 // pred_region
      _
    $region17: #{net_forward.1} parent=1 // pred_fallthru
      _
    // Predicated region
    $region18: #{net_forward.1} parent=1 // pred_check
      _
    $region19: #{net_forward.1} parent=1 // pred_check_branch
      %27 = sbr.rel (0) target = $region21
    $region20: #{net_forward.1} parent=1 // pred_region
      _
    $region21: #{net_forward.1} parent=1 // pred_fallthru
      _
    // Predicated region
    $region22: #{net_forward.1} parent=1 // pred_check
      _
    $region23: #{net_forward.1} parent=1 // pred_check_branch
      %29 = sbr.rel (0) target = $region25
    $region24: #{net_forward.1} parent=1 // pred_region
      %s31 = ssub.s32 3200, 3200
      %32 = vsyncadd [#allocation5], %s31
      %s33 = sshll.u32 [#allocation4], 4
      %s34 = int_to_ptr.vmem [resolvable:$true] %s33
      %39 = dma.hbm_to_vmem [thread:$0]  %s5, 3200, %s34, [#allocation5], 64, 64, 4
    $region25: #{net_forward.1} parent=1 // pred_fallthru
      _
    // Predicated region
    $region26: #{net_forward.1} parent=1 // pred_check
      _
    $region27: #{net_forward.1} parent=1 // pred_check_branch
      %41 = sbr.rel (0) target = $region29
    $region28: #{net_forward.1} parent=1 // pred_region
      _
    $region29: #{net_forward.1} parent=1 // pred_fallthru
      _
    // Predicated region
    $region30: #{net_forward.1} parent=1 // pred_check
      _
    $region31: #{net_forward.1} parent=1 // pred_check_branch
      %43 = sbr.rel (0) target = $region33
    $region32: #{net_forward.1} parent=1 // pred_region
      _
    $region33: #{net_forward.1} parent=1 // pred_fallthru
      _
    // Predicated region
    $region34: #{net_forward.1} parent=1 // pred_check
      _
    $region35: #{net_forward.1} parent=1 // pred_check_branch
      %45 = sbr.rel (0) target = $region37
    $region36: #{net_forward.1} parent=1 // pred_region
      _
    $region37: #{net_forward.1} parent=1 // pred_fallthru
      _
    // Predicated region
    $region38: #{net_forward.1} parent=1 // pred_check
      _
    $region39: #{net_forward.1} parent=1 // pred_check_branch
      %47 = sbr.rel (0) target = $region41
    $region40: #{net_forward.1} parent=1 // pred_region
      _
    $region41: #{net_forward.1} parent=1 // pred_fallthru
      _
    // Predicated region
    $region42: #{net_forward.1} parent=1 // pred_check
      _
    $region43: #{net_forward.1} parent=1 // pred_check_branch
      %49 = sbr.rel (0) target = $region45
    $region44: #{net_forward.1} parent=1 // pred_region
      _
    $region45: #{net_forward.1} parent=1 // pred_fallthru
      _
    // Predicated region
    $region46: #{net_forward.1} parent=1 // pred_check
      _
    $region47: #{net_forward.1} parent=1 // pred_check_branch
      %51 = sbr.rel (0) target = $region49
    $region48: #{net_forward.1} parent=1 // pred_region
      %52 = dma.done [#allocation5], 3200
    $region49: #{net_forward.1} parent=1 // pred_fallthru
      _
    %v54 = vld [vmem:[%s1] sm:$0xff]
    %v55 = vld [vmem:[%s1 + $0x8] sm:$0xff]
    %v56 = vld [vmem:[%s1 + $0x10] sm:$0xff]
    %v57 = vld [vmem:[%s1 + $0x18] sm:$0xff]
    %v58 = vld [vmem:[%s1 + $0x20] sm:$0xff]
    %v59 = vld [vmem:[%s1 + $0x28] sm:$0xff]
    %v60 = vld [vmem:[%s1 + $0x30] sm:$0xff]
    %v61 = vld [vmem:[%s1 + $0x38] sm:$0xff]
    %v62 = vld [vmem:[%s1 + $0x40] sm:$0xff]
    %v63 = vld [vmem:[%s1 + $0x48] sm:$0xff]
    %v64 = vld [vmem:[%s1 + $0x50] sm:$0xff]
    %v65 = vld [vmem:[%s1 + $0x58] sm:$0xff]
    %v66 = vld [vmem:[%s0] ss:$2 sm:$0xff]
    %s67 = scalar_lea.vmem %s0, 16
    %v68 = vld [vmem:[%s67] ss:$2 sm:$0xff]
    %s69 = scalar_lea.vmem %s0, 32
    %v70 = vld [vmem:[%s69] ss:$2 sm:$0xff]
    %s71 = scalar_lea.vmem %s0, 48
    %v72 = vld [vmem:[%s71] ss:$2 sm:$0x3f]
    %v73 = vpack.c.bf16 %v68, %v66
    %v74 = vpack.c.bf16 %v72, %v70
    %s75 = scalar_lea.vmem %s0, 1
    %v76 = vld [vmem:[%s75] ss:$2 sm:$0xff]
    %s77 = scalar_lea.vmem %s0, 17
    %v78 = vld [vmem:[%s77] ss:$2 sm:$0xff]
    %s79 = scalar_lea.vmem %s0, 33
    %v80 = vld [vmem:[%s79] ss:$2 sm:$0xff]
    %s81 = scalar_lea.vmem %s0, 49
    %v82 = vld [vmem:[%s81] ss:$2 sm:$0x3f]
    %v83 = vpack.c.bf16 %v78, %v76
    %v84 = vpack.c.bf16 %v82, %v80
    %s85 = scalar_lea.vmem %s1, 96
    %v86 = vld [vmem:[%s85] sm:$0xff]
    %v87 = vld [vmem:[%s85 + $0x8] sm:$0xff]
    %v88 = vld [vmem:[%s85 + $0x10] sm:$0xff]
    %v89 = vld [vmem:[%s85 + $0x18] sm:$0xff]
    %v90 = vld [vmem:[%s85 + $0x20] sm:$0xff]
    %v91 = vld [vmem:[%s85 + $0x28] sm:$0xff]
    %v92 = vld [vmem:[%s85 + $0x30] sm:$0xff]
    %v93 = vld [vmem:[%s85 + $0x38] sm:$0xff]
    %v94 = vld [vmem:[%s85 + $0x40] sm:$0xff]
    %v95 = vld [vmem:[%s85 + $0x48] sm:$0xff]
    %v96 = vld [vmem:[%s85 + $0x50] sm:$0xff]
    %v97 = vld [vmem:[%s85 + $0x58] sm:$0xff]
    %s98 = scalar_lea.vmem %s0, 2
    %v99 = vld [vmem:[%s98] ss:$2 sm:$0xff]
    %s100 = scalar_lea.vmem %s0, 18
    %v101 = vld [vmem:[%s100] ss:$2 sm:$0xff]
    %s102 = scalar_lea.vmem %s0, 34
    %v103 = vld [vmem:[%s102] ss:$2 sm:$0xff]
    %s104 = scalar_lea.vmem %s0, 50
    %v105 = vld [vmem:[%s104] ss:$2 sm:$0x3f]
    %v106 = vpack.c.bf16 %v101, %v99
    %v107 = vpack.c.bf16 %v105, %v103
    %v120 = vunpack.c.l.b16 %v86
    %v121 = vunpack.c.h.b16 %v86
    %v122 = vunpack.c.l.b16 %v87
    %v123 = vunpack.c.h.b16 %v87
    %v124 = vunpack.c.l.b16 %v88
    %v125 = vunpack.c.h.b16 %v88
    %v126 = vunpack.c.l.b16 %v89
    %v127 = vunpack.c.h.b16 %v89
    %v128 = vunpack.c.l.b16 %v90
    %v129 = vunpack.c.h.b16 %v90
    %v130 = vunpack.c.l.b16 %v91
    %v131 = vunpack.c.h.b16 %v91
    %v132 = vunpack.c.l.b16 %v92
    %v133 = vunpack.c.h.b16 %v92
    %v134 = vunpack.c.l.b16 %v93
    %v135 = vunpack.c.h.b16 %v93
    %v136 = vunpack.c.l.b16 %v94
    %v137 = vunpack.c.h.b16 %v94
    %v138 = vunpack.c.l.b16 %v95
    %v139 = vunpack.c.h.b16 %v95
    %v140 = vunpack.c.l.b16 %v96
    %v141 = vunpack.c.h.b16 %v96
    %v142 = vunpack.c.l.b16 %v97
    %v143 = vunpack.c.h.b16 %v97
    %v144 = vpack.c.b16 %v122, %v120
    %v145 = vpack.c.b16 %v123, %v121
    %v146 = vpack.c.b16 %v126, %v124
    %v147 = vpack.c.b16 %v127, %v125
    %v148 = vpack.c.b16 %v130, %v128
    %v149 = vpack.c.b16 %v131, %v129
    %v150 = vpack.c.b16 %v134, %v132
    %v151 = vpack.c.b16 %v135, %v133
    %v152 = vpack.c.b16 %v138, %v136
    %v153 = vpack.c.b16 %v139, %v137
    %v154 = vpack.c.b16 %v142, %v140
    %v155 = vpack.c.b16 %v143, %v141
    %vm168 = vcmask 785408
    %v170 = vsel %vm168, %v83, 0
    %v173 = vsel %vm168, %v84, 0
    %175 = vmatprep.subr.bf16.mxu0 %v145
    %176 = vmatpush1.bf16.msra.mxu0 %v144
    %177 = vmatprep.subr.bf16.mxu0 %v147
    %178 = vmatpush1.bf16.msra.mxu0 %v146
    %179 = vmatprep.subr.bf16.mxu0 %v149
    %180 = vmatpush1.bf16.msra.mxu0 %v148
    %181 = vmatprep.subr.bf16.mxu0 %v151
    %182 = vmatpush1.bf16.msra.mxu0 %v150
    %183 = vmatprep.subr.bf16.mxu0 %v153
    %184 = vmatpush1.bf16.msra.mxu0 %v152
    %185 = vmatprep.subr.bf16.mxu0 %v155
    %186 = vmatpush1.bf16.msra.mxu0 %v154
    %187 = vmatprep.subr.bf16.mxu0 0
    %188 = vmatpush1.bf16.msra.mxu0 0
    %189 = vmatprep.subr.bf16.mxu0 0
    %190 = vmatpush1.bf16.msra.mxu0 0
    %191 = vmatprep.subr.bf16.mxu0 0
    %192 = vmatpush1.bf16.msra.mxu0 0
    %193 = vmatprep.subr.bf16.mxu0 0
    %194 = vmatpush1.bf16.msra.mxu0 0
    %195 = vmatprep.subr.bf16.mxu0 0
    %196 = vmatpush1.bf16.msra.mxu0 0
    %197 = vmatprep.subr.bf16.mxu0 0
    %198 = vmatpush1.bf16.msra.mxu0 0
    %199 = vmatprep.subr.bf16.mxu0 0
    %200 = vmatpush1.bf16.msra.mxu0 0
    %201 = vmatprep.subr.bf16.mxu0 0
    %202 = vmatpush1.bf16.msra.mxu0 0
    %203 = vmatprep.subr.bf16.mxu0 0
    %204 = vmatpush1.bf16.msra.mxu0 0
    %205 = vmatprep.subr.bf16.mxu0 0
    %206 = vmatpush1.bf16.msra.mxu0 0
    %207 = vmatprep.mubr.bf16.mxu0 0
    %208 = vmatmul.mubr.bf16.gmra.mrb[0].mxu0 %v170
    %v209 = vpop.f32.mrb[0].mxu0
    %v210 = vadd.f32 0.0, %v209
    %v211 = vpop.f32.mrb[0].mxu0
    %v212 = vadd.f32 0.0, %v211
    %v213 = vpop.f32.mrb[0].mxu0
    %v214 = vadd.f32 0.0, %v213
    %v215 = vpop.f32.mrb[0].mxu0
    %v216 = vadd.f32 0.0, %v215
    %217 = vmatprep.mubr.bf16.mxu0 0
    %218 = vmatmul.mubr.bf16.gmra.mrb[0].mxu0 %v173
    %v219 = vpop.f32.mrb[0].mxu0
    %v220 = vadd.f32 0.0, %v219
    %v221 = vpop.f32.mrb[0].mxu0
    %v222 = vadd.f32 0.0, %v221
    %v223 = vpop.f32.mrb[0].mxu0
    %v224 = vadd.f32 0.0, %v223
    %v225 = vpop.f32.mrb[0].mxu0
    %v226 = vadd.f32 0.0, %v225
    %227 = vdwg.mxu0
    %v229 = vsel %vm168, %v106, 0
    %v232 = vsel %vm168, %v107, 0
    %234 = vmatprep.subr.bf16.mxu0 %v145
    %235 = vmatpush1.bf16.msra.mxu0 %v144
    %236 = vmatprep.subr.bf16.mxu0 %v147
    %237 = vmatpush1.bf16.msra.mxu0 %v146
    %238 = vmatprep.subr.bf16.mxu0 %v149
    %239 = vmatpush1.bf16.msra.mxu0 %v148
    %240 = vmatprep.subr.bf16.mxu0 %v151
    %241 = vmatpush1.bf16.msra.mxu0 %v150
    %242 = vmatprep.subr.bf16.mxu0 %v153
    %243 = vmatpush1.bf16.msra.mxu0 %v152
    %244 = vmatprep.subr.bf16.mxu0 %v155
    %245 = vmatpush1.bf16.msra.mxu0 %v154
    %246 = vmatprep.subr.bf16.mxu0 0
    %247 = vmatpush1.bf16.msra.mxu0 0
    %248 = vmatprep.subr.bf16.mxu0 0
    %249 = vmatpush1.bf16.msra.mxu0 0
    %250 = vmatprep.subr.bf16.mxu0 0
    %251 = vmatpush1.bf16.msra.mxu0 0
    %252 = vmatprep.subr.bf16.mxu0 0
    %253 = vmatpush1.bf16.msra.mxu0 0
    %254 = vmatprep.subr.bf16.mxu0 0
    %255 = vmatpush1.bf16.msra.mxu0 0
    %256 = vmatprep.subr.bf16.mxu0 0
    %257 = vmatpush1.bf16.msra.mxu0 0
    %258 = vmatprep.subr.bf16.mxu0 0
    %259 = vmatpush1.bf16.msra.mxu0 0
    %260 = vmatprep.subr.bf16.mxu0 0
    %261 = vmatpush1.bf16.msra.mxu0 0
    %262 = vmatprep.subr.bf16.mxu0 0
    %263 = vmatpush1.bf16.msra.mxu0 0
    %264 = vmatprep.subr.bf16.mxu0 0
    %265 = vmatpush1.bf16.msra.mxu0 0
    %266 = vmatprep.mubr.bf16.mxu0 0
    %267 = vmatmul.mubr.bf16.gmra.mrb[0].mxu0 %v229
    %v268 = vpop.f32.mrb[0].mxu0
    %v269 = vadd.f32 0.0, %v268
    %v270 = vpop.f32.mrb[0].mxu0
    %v271 = vadd.f32 0.0, %v270
    %v272 = vpop.f32.mrb[0].mxu0
    %v273 = vadd.f32 0.0, %v272
    %v274 = vpop.f32.mrb[0].mxu0
    %v275 = vadd.f32 0.0, %v274
    %276 = vmatprep.mubr.bf16.mxu0 0
    %277 = vmatmul.mubr.bf16.gmra.mrb[0].mxu0 %v232
    %v278 = vpop.f32.mrb[0].mxu0
    %v279 = vadd.f32 0.0, %v278
    %v280 = vpop.f32.mrb[0].mxu0
    %v281 = vadd.f32 0.0, %v280
    %v282 = vpop.f32.mrb[0].mxu0
    %v283 = vadd.f32 0.0, %v282
    %v284 = vpop.f32.mrb[0].mxu0
    %v285 = vadd.f32 0.0, %v284
    %286 = vdwg.mxu0
    %v299 = vunpack.c.l.b16 %v54
    %v300 = vunpack.c.h.b16 %v54
    %v301 = vunpack.c.l.b16 %v55
    %v302 = vunpack.c.h.b16 %v55
    %v303 = vunpack.c.l.b16 %v56
    %v304 = vunpack.c.h.b16 %v56
    %v305 = vunpack.c.l.b16 %v57
    %v306 = vunpack.c.h.b16 %v57
    %v307 = vunpack.c.l.b16 %v58
    %v308 = vunpack.c.h.b16 %v58
    %v309 = vunpack.c.l.b16 %v59
    %v310 = vunpack.c.h.b16 %v59
    %v311 = vunpack.c.l.b16 %v60
    %v312 = vunpack.c.h.b16 %v60
    %v313 = vunpack.c.l.b16 %v61
    %v314 = vunpack.c.h.b16 %v61
    %v315 = vunpack.c.l.b16 %v62
    %v316 = vunpack.c.h.b16 %v62
    %v317 = vunpack.c.l.b16 %v63
    %v318 = vunpack.c.h.b16 %v63
    %v319 = vunpack.c.l.b16 %v64
    %v320 = vunpack.c.h.b16 %v64
    %v321 = vunpack.c.l.b16 %v65
    %v322 = vunpack.c.h.b16 %v65
    %v323 = vpack.c.b16 %v301, %v299
    %v324 = vpack.c.b16 %v302, %v300
    %v325 = vpack.c.b16 %v305, %v303
    %v326 = vpack.c.b16 %v306, %v304
    %v327 = vpack.c.b16 %v309, %v307
    %v328 = vpack.c.b16 %v310, %v308
    %v329 = vpack.c.b16 %v313, %v311
    %v330 = vpack.c.b16 %v314, %v312
    %v331 = vpack.c.b16 %v317, %v315
    %v332 = vpack.c.b16 %v318, %v316
    %v333 = vpack.c.b16 %v321, %v319
    %v334 = vpack.c.b16 %v322, %v320
    %v348 = vsel %vm168, %v73, 0
    %v351 = vsel %vm168, %v74, 0
    %353 = vmatprep.subr.bf16.mxu0 %v324
    %354 = vmatpush1.bf16.msra.mxu0 %v323
    %355 = vmatprep.subr.bf16.mxu0 %v326
    %356 = vmatpush1.bf16.msra.mxu0 %v325
    %357 = vmatprep.subr.bf16.mxu0 %v328
    %358 = vmatpush1.bf16.msra.mxu0 %v327
    %359 = vmatprep.subr.bf16.mxu0 %v330
    %360 = vmatpush1.bf16.msra.mxu0 %v329
    %361 = vmatprep.subr.bf16.mxu0 %v332
    %362 = vmatpush1.bf16.msra.mxu0 %v331
    %363 = vmatprep.subr.bf16.mxu0 %v334
    %364 = vmatpush1.bf16.msra.mxu0 %v333
    %365 = vmatprep.subr.bf16.mxu0 0
    %366 = vmatpush1.bf16.msra.mxu0 0
    %367 = vmatprep.subr.bf16.mxu0 0
    %368 = vmatpush1.bf16.msra.mxu0 0
    %369 = vmatprep.subr.bf16.mxu0 0
    %370 = vmatpush1.bf16.msra.mxu0 0
    %371 = vmatprep.subr.bf16.mxu0 0
    %372 = vmatpush1.bf16.msra.mxu0 0
    %373 = vmatprep.subr.bf16.mxu0 0
    %374 = vmatpush1.bf16.msra.mxu0 0
    %375 = vmatprep.subr.bf16.mxu0 0
    %376 = vmatpush1.bf16.msra.mxu0 0
    %377 = vmatprep.subr.bf16.mxu0 0
    %378 = vmatpush1.bf16.msra.mxu0 0
    %379 = vmatprep.subr.bf16.mxu0 0
    %380 = vmatpush1.bf16.msra.mxu0 0
    %381 = vmatprep.subr.bf16.mxu0 0
    %382 = vmatpush1.bf16.msra.mxu0 0
    %383 = vmatprep.subr.bf16.mxu0 0
    %384 = vmatpush1.bf16.msra.mxu0 0
    %385 = vmatprep.mubr.bf16.mxu0 0
    %386 = vmatmul.mubr.bf16.gmra.mrb[0].mxu0 %v348
    %v387 = vpop.f32.mrb[0].mxu0
    %v388 = vadd.f32 %v210, %v387
    %v389 = vpop.f32.mrb[0].mxu0
    %v390 = vadd.f32 %v212, %v389
    %v391 = vpop.f32.mrb[0].mxu0
    %v392 = vadd.f32 %v214, %v391
    %v393 = vpop.f32.mrb[0].mxu0
    %v394 = vadd.f32 %v216, %v393
    %395 = vmatprep.mubr.bf16.mxu0 0
    %396 = vmatmul.mubr.bf16.gmra.mrb[0].mxu0 %v351
    %v397 = vpop.f32.mrb[0].mxu0
    %v398 = vadd.f32 %v220, %v397
    %v399 = vpop.f32.mrb[0].mxu0
    %v400 = vadd.f32 %v222, %v399
    %v401 = vpop.f32.mrb[0].mxu0
    %v402 = vadd.f32 %v224, %v401
    %v403 = vpop.f32.mrb[0].mxu0
    %v404 = vadd.f32 %v226, %v403
    %405 = vdwg.mxu0
    %406 = vmatprep.subr.bf16.mxu0 %v324
    %407 = vmatpush1.bf16.msra.mxu0 %v323
    %408 = vmatprep.subr.bf16.mxu0 %v326
    %409 = vmatpush1.bf16.msra.mxu0 %v325
    %410 = vmatprep.subr.bf16.mxu0 %v328
    %411 = vmatpush1.bf16.msra.mxu0 %v327
    %412 = vmatprep.subr.bf16.mxu0 %v330
    %413 = vmatpush1.bf16.msra.mxu0 %v329
    %414 = vmatprep.subr.bf16.mxu0 %v332
    %415 = vmatpush1.bf16.msra.mxu0 %v331
    %416 = vmatprep.subr.bf16.mxu0 %v334
    %417 = vmatpush1.bf16.msra.mxu0 %v333
    %418 = vmatprep.subr.bf16.mxu0 0
    %419 = vmatpush1.bf16.msra.mxu0 0
    %420 = vmatprep.subr.bf16.mxu0 0
    %421 = vmatpush1.bf16.msra.mxu0 0
    %422 = vmatprep.subr.bf16.mxu0 0
    %423 = vmatpush1.bf16.msra.mxu0 0
    %424 = vmatprep.subr.bf16.mxu0 0
    %425 = vmatpush1.bf16.msra.mxu0 0
    %426 = vmatprep.subr.bf16.mxu0 0
    %427 = vmatpush1.bf16.msra.mxu0 0
    %428 = vmatprep.subr.bf16.mxu0 0
    %429 = vmatpush1.bf16.msra.mxu0 0
    %430 = vmatprep.subr.bf16.mxu0 0
    %431 = vmatpush1.bf16.msra.mxu0 0
    %432 = vmatprep.subr.bf16.mxu0 0
    %433 = vmatpush1.bf16.msra.mxu0 0
    %434 = vmatprep.subr.bf16.mxu0 0
    %435 = vmatpush1.bf16.msra.mxu0 0
    %436 = vmatprep.subr.bf16.mxu0 0
    %437 = vmatpush1.bf16.msra.mxu0 0
    %438 = vmatprep.mubr.bf16.mxu0 0
    %439 = vmatmul.mubr.bf16.gmra.mrb[0].mxu0 %v170
    %v440 = vpop.f32.mrb[0].mxu0
    %v441 = vadd.f32 %v269, %v440
    %v442 = vpop.f32.mrb[0].mxu0
    %v443 = vadd.f32 %v271, %v442
    %v444 = vpop.f32.mrb[0].mxu0
    %v445 = vadd.f32 %v273, %v444
    %v446 = vpop.f32.mrb[0].mxu0
    %v447 = vadd.f32 %v275, %v446
    %448 = vmatprep.mubr.bf16.mxu0 0
    %449 = vmatmul.mubr.bf16.gmra.mrb[0].mxu0 %v173
    %v450 = vpop.f32.mrb[0].mxu0
    %v451 = vadd.f32 %v279, %v450
    %v452 = vpop.f32.mrb[0].mxu0
    %v453 = vadd.f32 %v281, %v452
    %v454 = vpop.f32.mrb[0].mxu0
    %v455 = vadd.f32 %v283, %v454
    %v456 = vpop.f32.mrb[0].mxu0
    %v457 = vadd.f32 %v285, %v456
    %458 = vdwg.mxu0
    %s459 = scalar_lea.vmem %s1, 192
    %v460 = vld [vmem:[%s459] sm:$0xff]
    %v461 = vld [vmem:[%s459 + $0x8] sm:$0xff]
    %v462 = vld [vmem:[%s459 + $0x10] sm:$0xff]
    %v463 = vld [vmem:[%s459 + $0x18] sm:$0xff]
    %v464 = vld [vmem:[%s459 + $0x20] sm:$0xff]
    %v465 = vld [vmem:[%s459 + $0x28] sm:$0xff]
    %v466 = vld [vmem:[%s459 + $0x30] sm:$0xff]
    %v467 = vld [vmem:[%s459 + $0x38] sm:$0xff]
    %v468 = vld [vmem:[%s459 + $0x40] sm:$0xff]
    %v469 = vld [vmem:[%s459 + $0x48] sm:$0xff]
    %v470 = vld [vmem:[%s459 + $0x50] sm:$0xff]
    %v471 = vld [vmem:[%s459 + $0x58] sm:$0xff]
    %s472 = scalar_lea.vmem %s0, 3
    %v473 = vld [vmem:[%s472] ss:$2 sm:$0xff]
    %s474 = scalar_lea.vmem %s0, 19
    %v475 = vld [vmem:[%s474] ss:$2 sm:$0xff]
    %s476 = scalar_lea.vmem %s0, 35
    %v477 = vld [vmem:[%s476] ss:$2 sm:$0xff]
    %s478 = scalar_lea.vmem %s0, 51
    %v479 = vld [vmem:[%s478] ss:$2 sm:$0x3f]
    %v480 = vpack.c.bf16 %v475, %v473
    %v481 = vpack.c.bf16 %v479, %v477
    %v494 = vunpack.c.l.b16 %v460
    %v495 = vunpack.c.h.b16 %v460
    %v496 = vunpack.c.l.b16 %v461
    %v497 = vunpack.c.h.b16 %v461
    %v498 = vunpack.c.l.b16 %v462
    %v499 = vunpack.c.h.b16 %v462
    %v500 = vunpack.c.l.b16 %v463
    %v501 = vunpack.c.h.b16 %v463
    %v502 = vunpack.c.l.b16 %v464
    %v503 = vunpack.c.h.b16 %v464
    %v504 = vunpack.c.l.b16 %v465
    %v505 = vunpack.c.h.b16 %v465
    %v506 = vunpack.c.l.b16 %v466
    %v507 = vunpack.c.h.b16 %v466
    %v508 = vunpack.c.l.b16 %v467
    %v509 = vunpack.c.h.b16 %v467
    %v510 = vunpack.c.l.b16 %v468
    %v511 = vunpack.c.h.b16 %v468
    %v512 = vunpack.c.l.b16 %v469
    %v513 = vunpack.c.h.b16 %v469
    %v514 = vunpack.c.l.b16 %v470
    %v515 = vunpack.c.h.b16 %v470
    %v516 = vunpack.c.l.b16 %v471
    %v517 = vunpack.c.h.b16 %v471
    %v518 = vpack.c.b16 %v496, %v494
    %v519 = vpack.c.b16 %v497, %v495
    %v520 = vpack.c.b16 %v500, %v498
    %v521 = vpack.c.b16 %v501, %v499
    %v522 = vpack.c.b16 %v504, %v502
    %v523 = vpack.c.b16 %v505, %v503
    %v524 = vpack.c.b16 %v508, %v506
    %v525 = vpack.c.b16 %v509, %v507
    %v526 = vpack.c.b16 %v512, %v510
    %v527 = vpack.c.b16 %v513, %v511
    %v528 = vpack.c.b16 %v516, %v514
    %v529 = vpack.c.b16 %v517, %v515
    %542 = vmatprep.subr.bf16.mxu0 %v519
    %543 = vmatpush1.bf16.msra.mxu0 %v518
    %544 = vmatprep.subr.bf16.mxu0 %v521
    %545 = vmatpush1.bf16.msra.mxu0 %v520
    %546 = vmatprep.subr.bf16.mxu0 %v523
    %547 = vmatpush1.bf16.msra.mxu0 %v522
    %548 = vmatprep.subr.bf16.mxu0 %v525
    %549 = vmatpush1.bf16.msra.mxu0 %v524
    %550 = vmatprep.subr.bf16.mxu0 %v527
    %551 = vmatpush1.bf16.msra.mxu0 %v526
    %552 = vmatprep.subr.bf16.mxu0 %v529
    %553 = vmatpush1.bf16.msra.mxu0 %v528
    %554 = vmatprep.subr.bf16.mxu0 0
    %555 = vmatpush1.bf16.msra.mxu0 0
    %556 = vmatprep.subr.bf16.mxu0 0
    %557 = vmatpush1.bf16.msra.mxu0 0
    %558 = vmatprep.subr.bf16.mxu0 0
    %559 = vmatpush1.bf16.msra.mxu0 0
    %560 = vmatprep.subr.bf16.mxu0 0
    %561 = vmatpush1.bf16.msra.mxu0 0
    %562 = vmatprep.subr.bf16.mxu0 0
    %563 = vmatpush1.bf16.msra.mxu0 0
    %564 = vmatprep.subr.bf16.mxu0 0
    %565 = vmatpush1.bf16.msra.mxu0 0
    %566 = vmatprep.subr.bf16.mxu0 0
    %567 = vmatpush1.bf16.msra.mxu0 0
    %568 = vmatprep.subr.bf16.mxu0 0
    %569 = vmatpush1.bf16.msra.mxu0 0
    %570 = vmatprep.subr.bf16.mxu0 0
    %571 = vmatpush1.bf16.msra.mxu0 0
    %572 = vmatprep.subr.bf16.mxu0 0
    %573 = vmatpush1.bf16.msra.mxu0 0
    %574 = vmatprep.mubr.bf16.mxu0 0
    %575 = vmatmul.mubr.bf16.gmra.mrb[0].mxu0 %v229
    %v576 = vpop.f32.mrb[0].mxu0
    %v577 = vadd.f32 0.0, %v576
    %v578 = vpop.f32.mrb[0].mxu0
    %v579 = vadd.f32 0.0, %v578
    %v580 = vpop.f32.mrb[0].mxu0
    %v581 = vadd.f32 0.0, %v580
    %v582 = vpop.f32.mrb[0].mxu0
    %v583 = vadd.f32 0.0, %v582
    %584 = vmatprep.mubr.bf16.mxu0 0
    %585 = vmatmul.mubr.bf16.gmra.mrb[0].mxu0 %v232
    %v586 = vpop.f32.mrb[0].mxu0
    %v587 = vadd.f32 0.0, %v586
    %v588 = vpop.f32.mrb[0].mxu0
    %v589 = vadd.f32 0.0, %v588
    %v590 = vpop.f32.mrb[0].mxu0
    %v591 = vadd.f32 0.0, %v590
    %v592 = vpop.f32.mrb[0].mxu0
    %v593 = vadd.f32 0.0, %v592
    %594 = vdwg.mxu0
    %v596 = vsel %vm168, %v480, 0
    %v599 = vsel %vm168, %v481, 0
    %601 = vmatprep.subr.bf16.mxu0 %v519
    %602 = vmatpush1.bf16.msra.mxu0 %v518
    %603 = vmatprep.subr.bf16.mxu0 %v521
    %604 = vmatpush1.bf16.msra.mxu0 %v520
    %605 = vmatprep.subr.bf16.mxu0 %v523
    %606 = vmatpush1.bf16.msra.mxu0 %v522
    %607 = vmatprep.subr.bf16.mxu0 %v525
    %608 = vmatpush1.bf16.msra.mxu0 %v524
    %609 = vmatprep.subr.bf16.mxu0 %v527
    %610 = vmatpush1.bf16.msra.mxu0 %v526
    %611 = vmatprep.subr.bf16.mxu0 %v529
    %612 = vmatpush1.bf16.msra.mxu0 %v528
    %613 = vmatprep.subr.bf16.mxu0 0
    %614 = vmatpush1.bf16.msra.mxu0 0
    %615 = vmatprep.subr.bf16.mxu0 0
    %616 = vmatpush1.bf16.msra.mxu0 0
    %617 = vmatprep.subr.bf16.mxu0 0
    %618 = vmatpush1.bf16.msra.mxu0 0
    %619 = vmatprep.subr.bf16.mxu0 0
    %620 = vmatpush1.bf16.msra.mxu0 0
    %621 = vmatprep.subr.bf16.mxu0 0
    %622 = vmatpush1.bf16.msra.mxu0 0
    %623 = vmatprep.subr.bf16.mxu0 0
    %624 = vmatpush1.bf16.msra.mxu0 0
    %625 = vmatprep.subr.bf16.mxu0 0
    %626 = vmatpush1.bf16.msra.mxu0 0
    %627 = vmatprep.subr.bf16.mxu0 0
    %628 = vmatpush1.bf16.msra.mxu0 0
    %629 = vmatprep.subr.bf16.mxu0 0
    %630 = vmatpush1.bf16.msra.mxu0 0
    %631 = vmatprep.subr.bf16.mxu0 0
    %632 = vmatpush1.bf16.msra.mxu0 0
    %633 = vmatprep.mubr.bf16.mxu0 0
    %634 = vmatmul.mubr.bf16.gmra.mrb[0].mxu0 %v596
    %v635 = vpop.f32.mrb[0].mxu0
    %v636 = vadd.f32 0.0, %v635
    %v637 = vpop.f32.mrb[0].mxu0
    %v638 = vadd.f32 0.0, %v637
    %v639 = vpop.f32.mrb[0].mxu0
    %v640 = vadd.f32 0.0, %v639
    %v641 = vpop.f32.mrb[0].mxu0
    %v642 = vadd.f32 0.0, %v641
    %643 = vmatprep.mubr.bf16.mxu0 0
    %644 = vmatmul.mubr.bf16.gmra.mrb[0].mxu0 %v599
    %v645 = vpop.f32.mrb[0].mxu0
    %v646 = vadd.f32 0.0, %v645
    %v647 = vpop.f32.mrb[0].mxu0
    %v648 = vadd.f32 0.0, %v647
    %v649 = vpop.f32.mrb[0].mxu0
    %v650 = vadd.f32 0.0, %v649
    %v651 = vpop.f32.mrb[0].mxu0
    %v652 = vadd.f32 0.0, %v651
    %653 = vdwg.mxu0
    %v654 = vadd.f32 %v388, %v577
    %v655 = vadd.f32 %v390, %v579
    %v656 = vadd.f32 %v392, %v581
    %v657 = vadd.f32 %v394, %v583
    %v658 = vadd.f32 %v398, %v587
    %v659 = vadd.f32 %v400, %v589
    %v660 = vadd.f32 %v402, %v591
    %v661 = vadd.f32 %v404, %v593
    %v662 = vadd.f32 %v441, %v636
    %v663 = vadd.f32 %v443, %v638
    %v664 = vadd.f32 %v445, %v640
    %v665 = vadd.f32 %v447, %v642
    %v666 = vadd.f32 %v451, %v646
    %v667 = vadd.f32 %v453, %v648
    %v668 = vadd.f32 %v455, %v650
    %v669 = vadd.f32 %v457, %v652
    %s670 = scalar_lea.vmem %s1, 288
    %v671 = vld [vmem:[%s670] sm:$0xff]
    %v672 = vld [vmem:[%s670 + $0x8] sm:$0xff]
    %v673 = vld [vmem:[%s670 + $0x10] sm:$0xff]
    %v674 = vld [vmem:[%s670 + $0x18] sm:$0xff]
    %v675 = vld [vmem:[%s670 + $0x20] sm:$0xff]
    %v676 = vld [vmem:[%s670 + $0x28] sm:$0xff]
    %v677 = vld [vmem:[%s670 + $0x30] sm:$0xff]
    %v678 = vld [vmem:[%s670 + $0x38] sm:$0xff]
    %v679 = vld [vmem:[%s670 + $0x40] sm:$0xff]
    %v680 = vld [vmem:[%s670 + $0x48] sm:$0xff]
    %v681 = vld [vmem:[%s670 + $0x50] sm:$0xff]
    %v682 = vld [vmem:[%s670 + $0x58] sm:$0xff]
    %s683 = scalar_lea.vmem %s0, 4
    %v684 = vld [vmem:[%s683] ss:$2 sm:$0xff]
    %s685 = scalar_lea.vmem %s0, 20
    %v686 = vld [vmem:[%s685] ss:$2 sm:$0xff]
    %s687 = scalar_lea.vmem %s0, 36
    %v688 = vld [vmem:[%s687] ss:$2 sm:$0xff]
    %s689 = scalar_lea.vmem %s0, 52
    %v690 = vld [vmem:[%s689] ss:$2 sm:$0x3f]
    %v691 = vpack.c.bf16 %v686, %v684
    %v692 = vpack.c.bf16 %v690, %v688
    %v705 = vunpack.c.l.b16 %v671
    %v706 = vunpack.c.h.b16 %v671
    %v707 = vunpack.c.l.b16 %v672
    %v708 = vunpack.c.h.b16 %v672
    %v709 = vunpack.c.l.b16 %v673
    %v710 = vunpack.c.h.b16 %v673
    %v711 = vunpack.c.l.b16 %v674
    %v712 = vunpack.c.h.b16 %v674
    %v713 = vunpack.c.l.b16 %v675
    %v714 = vunpack.c.h.b16 %v675
    %v715 = vunpack.c.l.b16 %v676
    %v716 = vunpack.c.h.b16 %v676
    %v717 = vunpack.c.l.b16 %v677
    %v718 = vunpack.c.h.b16 %v677
    %v719 = vunpack.c.l.b16 %v678
    %v720 = vunpack.c.h.b16 %v678
    %v721 = vunpack.c.l.b16 %v679
    %v722 = vunpack.c.h.b16 %v679
    %v723 = vunpack.c.l.b16 %v680
    %v724 = vunpack.c.h.b16 %v680
    %v725 = vunpack.c.l.b16 %v681
    %v726 = vunpack.c.h.b16 %v681
    %v727 = vunpack.c.l.b16 %v682
    %v728 = vunpack.c.h.b16 %v682
    %v729 = vpack.c.b16 %v707, %v705
    %v730 = vpack.c.b16 %v708, %v706
    %v731 = vpack.c.b16 %v711, %v709
    %v732 = vpack.c.b16 %v712, %v710
    %v733 = vpack.c.b16 %v715, %v713
    %v734 = vpack.c.b16 %v716, %v714
    %v735 = vpack.c.b16 %v719, %v717
    %v736 = vpack.c.b16 %v720, %v718
    %v737 = vpack.c.b16 %v723, %v721
    %v738 = vpack.c.b16 %v724, %v722
    %v739 = vpack.c.b16 %v727, %v725
    %v740 = vpack.c.b16 %v728, %v726
    %753 = vmatprep.subr.bf16.mxu0 %v730
    %754 = vmatpush1.bf16.msra.mxu0 %v729
    %755 = vmatprep.subr.bf16.mxu0 %v732
    %756 = vmatpush1.bf16.msra.mxu0 %v731
    %757 = vmatprep.subr.bf16.mxu0 %v734
    %758 = vmatpush1.bf16.msra.mxu0 %v733
    %759 = vmatprep.subr.bf16.mxu0 %v736
    %760 = vmatpush1.bf16.msra.mxu0 %v735
    %761 = vmatprep.subr.bf16.mxu0 %v738
    %762 = vmatpush1.bf16.msra.mxu0 %v737
    %763 = vmatprep.subr.bf16.mxu0 %v740
    %764 = vmatpush1.bf16.msra.mxu0 %v739
    %765 = vmatprep.subr.bf16.mxu0 0
    %766 = vmatpush1.bf16.msra.mxu0 0
    %767 = vmatprep.subr.bf16.mxu0 0
    %768 = vmatpush1.bf16.msra.mxu0 0
    %769 = vmatprep.subr.bf16.mxu0 0
    %770 = vmatpush1.bf16.msra.mxu0 0
    %771 = vmatprep.subr.bf16.mxu0 0
    %772 = vmatpush1.bf16.msra.mxu0 0
    %773 = vmatprep.subr.bf16.mxu0 0
    %774 = vmatpush1.bf16.msra.mxu0 0
    %775 = vmatprep.subr.bf16.mxu0 0
    %776 = vmatpush1.bf16.msra.mxu0 0
    %777 = vmatprep.subr.bf16.mxu0 0
    %778 = vmatpush1.bf16.msra.mxu0 0
    %779 = vmatprep.subr.bf16.mxu0 0
    %780 = vmatpush1.bf16.msra.mxu0 0
    %781 = vmatprep.subr.bf16.mxu0 0
    %782 = vmatpush1.bf16.msra.mxu0 0
    %783 = vmatprep.subr.bf16.mxu0 0
    %784 = vmatpush1.bf16.msra.mxu0 0
    %785 = vmatprep.mubr.bf16.mxu0 0
    %786 = vmatmul.mubr.bf16.gmra.mrb[0].mxu0 %v596
    %v787 = vpop.f32.mrb[0].mxu0
    %v788 = vadd.f32 0.0, %v787
    %v789 = vpop.f32.mrb[0].mxu0
    %v790 = vadd.f32 0.0, %v789
    %v791 = vpop.f32.mrb[0].mxu0
    %v792 = vadd.f32 0.0, %v791
    %v793 = vpop.f32.mrb[0].mxu0
    %v794 = vadd.f32 0.0, %v793
    %795 = vmatprep.mubr.bf16.mxu0 0
    %796 = vmatmul.mubr.bf16.gmra.mrb[0].mxu0 %v599
    %v797 = vpop.f32.mrb[0].mxu0
    %v798 = vadd.f32 0.0, %v797
    %v799 = vpop.f32.mrb[0].mxu0
    %v800 = vadd.f32 0.0, %v799
    %v801 = vpop.f32.mrb[0].mxu0
    %v802 = vadd.f32 0.0, %v801
    %v803 = vpop.f32.mrb[0].mxu0
    %v804 = vadd.f32 0.0, %v803
    %805 = vdwg.mxu0
    %v807 = vsel %vm168, %v691, 0
    %v810 = vsel %vm168, %v692, 0
    %812 = vmatprep.subr.bf16.mxu0 %v730
    %813 = vmatpush1.bf16.msra.mxu0 %v729
    %814 = vmatprep.subr.bf16.mxu0 %v732
    %815 = vmatpush1.bf16.msra.mxu0 %v731
    %816 = vmatprep.subr.bf16.mxu0 %v734
    %817 = vmatpush1.bf16.msra.mxu0 %v733
    %818 = vmatprep.subr.bf16.mxu0 %v736
    %819 = vmatpush1.bf16.msra.mxu0 %v735
    %820 = vmatprep.subr.bf16.mxu0 %v738
    %821 = vmatpush1.bf16.msra.mxu0 %v737
    %822 = vmatprep.subr.bf16.mxu0 %v740
    %823 = vmatpush1.bf16.msra.mxu0 %v739
    %824 = vmatprep.subr.bf16.mxu0 0
    %825 = vmatpush1.bf16.msra.mxu0 0
    %826 = vmatprep.subr.bf16.mxu0 0
    %827 = vmatpush1.bf16.msra.mxu0 0
    %828 = vmatprep.subr.bf16.mxu0 0
    %829 = vmatpush1.bf16.msra.mxu0 0
    %830 = vmatprep.subr.bf16.mxu0 0
    %831 = vmatpush1.bf16.msra.mxu0 0
    %832 = vmatprep.subr.bf16.mxu0 0
    %833 = vmatpush1.bf16.msra.mxu0 0
    %834 = vmatprep.subr.bf16.mxu0 0
    %835 = vmatpush1.bf16.msra.mxu0 0
    %836 = vmatprep.subr.bf16.mxu0 0
    %837 = vmatpush1.bf16.msra.mxu0 0
    %838 = vmatprep.subr.bf16.mxu0 0
    %839 = vmatpush1.bf16.msra.mxu0 0
    %840 = vmatprep.subr.bf16.mxu0 0
    %841 = vmatpush1.bf16.msra.mxu0 0
    %842 = vmatprep.subr.bf16.mxu0 0
    %843 = vmatpush1.bf16.msra.mxu0 0
    %844 = vmatprep.mubr.bf16.mxu0 0
    %845 = vmatmul.mubr.bf16.gmra.mrb[0].mxu0 %v807
    %v846 = vpop.f32.mrb[0].mxu0
    %v847 = vadd.f32 0.0, %v846
    %v848 = vpop.f32.mrb[0].mxu0
    %v849 = vadd.f32 0.0, %v848
    %v850 = vpop.f32.mrb[0].mxu0
    %v851 = vadd.f32 0.0, %v850
    %v852 = vpop.f32.mrb[0].mxu0
    %v853 = vadd.f32 0.0, %v852
    %854 = vmatprep.mubr.bf16.mxu0 0
    %855 = vmatmul.mubr.bf16.gmra.mrb[0].mxu0 %v810
    %v856 = vpop.f32.mrb[0].mxu0
    %v857 = vadd.f32 0.0, %v856
    %v858 = vpop.f32.mrb[0].mxu0
    %v859 = vadd.f32 0.0, %v858
    %v860 = vpop.f32.mrb[0].mxu0
    %v861 = vadd.f32 0.0, %v860
    %v862 = vpop.f32.mrb[0].mxu0
    %v863 = vadd.f32 0.0, %v862
    %864 = vdwg.mxu0
    %v865 = vadd.f32 %v654, %v788
    %v866 = vadd.f32 %v655, %v790
    %v867 = vadd.f32 %v656, %v792
    %v868 = vadd.f32 %v657, %v794
    %v869 = vadd.f32 %v658, %v798
    %v870 = vadd.f32 %v659, %v800
    %v871 = vadd.f32 %v660, %v802
    %v872 = vadd.f32 %v661, %v804
    %v873 = vadd.f32 %v662, %v847
    %v874 = vadd.f32 %v663, %v849
    %v875 = vadd.f32 %v664, %v851
    %v876 = vadd.f32 %v665, %v853
    %v877 = vadd.f32 %v666, %v857
    %v878 = vadd.f32 %v667, %v859
    %v879 = vadd.f32 %v668, %v861
    %v880 = vadd.f32 %v669, %v863
    %s881 = scalar_lea.vmem %s1, 384
    %v882 = vld [vmem:[%s881] sm:$0xff]
    %v883 = vld [vmem:[%s881 + $0x8] sm:$0xff]
    %v884 = vld [vmem:[%s881 + $0x10] sm:$0xff]
    %v885 = vld [vmem:[%s881 + $0x18] sm:$0xff]
    %v886 = vld [vmem:[%s881 + $0x20] sm:$0xff]
    %v887 = vld [vmem:[%s881 + $0x28] sm:$0xff]
    %v888 = vld [vmem:[%s881 + $0x30] sm:$0xff]
    %v889 = vld [vmem:[%s881 + $0x38] sm:$0xff]
    %v890 = vld [vmem:[%s881 + $0x40] sm:$0xff]
    %v891 = vld [vmem:[%s881 + $0x48] sm:$0xff]
    %v892 = vld [vmem:[%s881 + $0x50] sm:$0xff]
    %v893 = vld [vmem:[%s881 + $0x58] sm:$0xff]
    %s894 = scalar_lea.vmem %s0, 5
    %v895 = vld [vmem:[%s894] ss:$2 sm:$0xff]
    %s896 = scalar_lea.vmem %s0, 21
    %v897 = vld [vmem:[%s896] ss:$2 sm:$0xff]
    %s898 = scalar_lea.vmem %s0, 37
    %v899 = vld [vmem:[%s898] ss:$2 sm:$0xff]
    %s900 = scalar_lea.vmem %s0, 53
    %v901 = vld [vmem:[%s900] ss:$2 sm:$0x3f]
    %v902 = vpack.c.bf16 %v897, %v895
    %v903 = vpack.c.bf16 %v901, %v899
    %v916 = vunpack.c.l.b16 %v882
    %v917 = vunpack.c.h.b16 %v882
    %v918 = vunpack.c.l.b16 %v883
    %v919 = vunpack.c.h.b16 %v883
    %v920 = vunpack.c.l.b16 %v884
    %v921 = vunpack.c.h.b16 %v884
    %v922 = vunpack.c.l.b16 %v885
    %v923 = vunpack.c.h.b16 %v885
    %v924 = vunpack.c.l.b16 %v886
    %v925 = vunpack.c.h.b16 %v886
    %v926 = vunpack.c.l.b16 %v887
    %v927 = vunpack.c.h.b16 %v887
    %v928 = vunpack.c.l.b16 %v888
    %v929 = vunpack.c.h.b16 %v888
    %v930 = vunpack.c.l.b16 %v889
    %v931 = vunpack.c.h.b16 %v889
    %v932 = vunpack.c.l.b16 %v890
    %v933 = vunpack.c.h.b16 %v890
    %v934 = vunpack.c.l.b16 %v891
    %v935 = vunpack.c.h.b16 %v891
    %v936 = vunpack.c.l.b16 %v892
    %v937 = vunpack.c.h.b16 %v892
    %v938 = vunpack.c.l.b16 %v893
    %v939 = vunpack.c.h.b16 %v893
    %v940 = vpack.c.b16 %v918, %v916
    %v941 = vpack.c.b16 %v919, %v917
    %v942 = vpack.c.b16 %v922, %v920
    %v943 = vpack.c.b16 %v923, %v921
    %v944 = vpack.c.b16 %v926, %v924
    %v945 = vpack.c.b16 %v927, %v925
    %v946 = vpack.c.b16 %v930, %v928
    %v947 = vpack.c.b16 %v931, %v929
    %v948 = vpack.c.b16 %v934, %v932
    %v949 = vpack.c.b16 %v935, %v933
    %v950 = vpack.c.b16 %v938, %v936
    %v951 = vpack.c.b16 %v939, %v937
    %964 = vmatprep.subr.bf16.mxu0 %v941
    %965 = vmatpush1.bf16.msra.mxu0 %v940
    %966 = vmatprep.subr.bf16.mxu0 %v943
    %967 = vmatpush1.bf16.msra.mxu0 %v942
    %968 = vmatprep.subr.bf16.mxu0 %v945
    %969 = vmatpush1.bf16.msra.mxu0 %v944
    %970 = vmatprep.subr.bf16.mxu0 %v947
    %971 = vmatpush1.bf16.msra.mxu0 %v946
    %972 = vmatprep.subr.bf16.mxu0 %v949
    %973 = vmatpush1.bf16.msra.mxu0 %v948
    %974 = vmatprep.subr.bf16.mxu0 %v951
    %975 = vmatpush1.bf16.msra.mxu0 %v950
    %976 = vmatprep.subr.bf16.mxu0 0
    %977 = vmatpush1.bf16.msra.mxu0 0
    %978 = vmatprep.subr.bf16.mxu0 0
    %979 = vmatpush1.bf16.msra.mxu0 0
    %980 = vmatprep.subr.bf16.mxu0 0
    %981 = vmatpush1.bf16.msra.mxu0 0
    %982 = vmatprep.subr.bf16.mxu0 0
    %983 = vmatpush1.bf16.msra.mxu0 0
    %984 = vmatprep.subr.bf16.mxu0 0
    %985 = vmatpush1.bf16.msra.mxu0 0
    %986 = vmatprep.subr.bf16.mxu0 0
    %987 = vmatpush1.bf16.msra.mxu0 0
    %988 = vmatprep.subr.bf16.mxu0 0
    %989 = vmatpush1.bf16.msra.mxu0 0
    %990 = vmatprep.subr.bf16.mxu0 0
    %991 = vmatpush1.bf16.msra.mxu0 0
    %992 = vmatprep.subr.bf16.mxu0 0
    %993 = vmatpush1.bf16.msra.mxu0 0
    %994 = vmatprep.subr.bf16.mxu0 0
    %995 = vmatpush1.bf16.msra.mxu0 0
    %996 = vmatprep.mubr.bf16.mxu0 0
    %997 = vmatmul.mubr.bf16.gmra.mrb[0].mxu0 %v807
    %v998 = vpop.f32.mrb[0].mxu0
    %v999 = vadd.f32 0.0, %v998
    %v1000 = vpop.f32.mrb[0].mxu0
    %v1001 = vadd.f32 0.0, %v1000
    %v1002 = vpop.f32.mrb[0].mxu0
    %v1003 = vadd.f32 0.0, %v1002
    %v1004 = vpop.f32.mrb[0].mxu0
    %v1005 = vadd.f32 0.0, %v1004
    %1006 = vmatprep.mubr.bf16.mxu0 0
    %1007 = vmatmul.mubr.bf16.gmra.mrb[0].mxu0 %v810
    %v1008 = vpop.f32.mrb[0].mxu0
    %v1009 = vadd.f32 0.0, %v1008
    %v1010 = vpop.f32.mrb[0].mxu0
    %v1011 = vadd.f32 0.0, %v1010
    %v1012 = vpop.f32.mrb[0].mxu0
    %v1013 = vadd.f32 0.0, %v1012
    %v1014 = vpop.f32.mrb[0].mxu0
    %v1015 = vadd.f32 0.0, %v1014
    %1016 = vdwg.mxu0
    %v1018 = vsel %vm168, %v902, 0
    %v1021 = vsel %vm168, %v903, 0
    %1023 = vmatprep.subr.bf16.mxu0 %v941
    %1024 = vmatpush1.bf16.msra.mxu0 %v940
    %1025 = vmatprep.subr.bf16.mxu0 %v943
    %1026 = vmatpush1.bf16.msra.mxu0 %v942
    %1027 = vmatprep.subr.bf16.mxu0 %v945
    %1028 = vmatpush1.bf16.msra.mxu0 %v944
    %1029 = vmatprep.subr.bf16.mxu0 %v947
    %1030 = vmatpush1.bf16.msra.mxu0 %v946
    %1031 = vmatprep.subr.bf16.mxu0 %v949
    %1032 = vmatpush1.bf16.msra.mxu0 %v948
    %1033 = vmatprep.subr.bf16.mxu0 %v951
    %1034 = vmatpush1.bf16.msra.mxu0 %v950
    %1035 = vmatprep.subr.bf16.mxu0 0
    %1036 = vmatpush1.bf16.msra.mxu0 0
    %1037 = vmatprep.subr.bf16.mxu0 0
    %1038 = vmatpush1.bf16.msra.mxu0 0
    %1039 = vmatprep.subr.bf16.mxu0 0
    %1040 = vmatpush1.bf16.msra.mxu0 0
    %1041 = vmatprep.subr.bf16.mxu0 0
    %1042 = vmatpush1.bf16.msra.mxu0 0
    %1043 = vmatprep.subr.bf16.mxu0 0
    %1044 = vmatpush1.bf16.msra.mxu0 0
    %1045 = vmatprep.subr.bf16.mxu0 0
    %1046 = vmatpush1.bf16.msra.mxu0 0
    %1047 = vmatprep.subr.bf16.mxu0 0
    %1048 = vmatpush1.bf16.msra.mxu0 0
    %1049 = vmatprep.subr.bf16.mxu0 0
    %1050 = vmatpush1.bf16.msra.mxu0 0
    %1051 = vmatprep.subr.bf16.mxu0 0
    %1052 = vmatpush1.bf16.msra.mxu0 0
    %1053 = vmatprep.subr.bf16.mxu0 0
    %1054 = vmatpush1.bf16.msra.mxu0 0
    %1055 = vmatprep.mubr.bf16.mxu0 0
    %1056 = vmatmul.mubr.bf16.gmra.mrb[0].mxu0 %v1018
    %v1057 = vpop.f32.mrb[0].mxu0
    %v1058 = vadd.f32 0.0, %v1057
    %v1059 = vpop.f32.mrb[0].mxu0
    %v1060 = vadd.f32 0.0, %v1059
    %v1061 = vpop.f32.mrb[0].mxu0
    %v1062 = vadd.f32 0.0, %v1061
    %v1063 = vpop.f32.mrb[0].mxu0
    %v1064 = vadd.f32 0.0, %v1063
    %1065 = vmatprep.mubr.bf16.mxu0 0
    %1066 = vmatmul.mubr.bf16.gmra.mrb[0].mxu0 %v1021
    %v1067 = vpop.f32.mrb[0].mxu0
    %v1068 = vadd.f32 0.0, %v1067
    %v1069 = vpop.f32.mrb[0].mxu0
    %v1070 = vadd.f32 0.0, %v1069
    %v1071 = vpop.f32.mrb[0].mxu0
    %v1072 = vadd.f32 0.0, %v1071
    %v1073 = vpop.f32.mrb[0].mxu0
    %v1074 = vadd.f32 0.0, %v1073
    %1075 = vdwg.mxu0
    %v1076 = vadd.f32 %v865, %v999
    %v1077 = vadd.f32 %v866, %v1001
    %v1078 = vadd.f32 %v867, %v1003
    %v1079 = vadd.f32 %v868, %v1005
    %v1080 = vadd.f32 %v869, %v1009
    %v1081 = vadd.f32 %v870, %v1011
    %v1082 = vadd.f32 %v871, %v1013
    %v1083 = vadd.f32 %v872, %v1015
    %v1084 = vadd.f32 %v873, %v1058
    %v1085 = vadd.f32 %v874, %v1060
    %v1086 = vadd.f32 %v875, %v1062
    %v1087 = vadd.f32 %v876, %v1064
    %v1088 = vadd.f32 %v877, %v1068
    %v1089 = vadd.f32 %v878, %v1070
    %v1090 = vadd.f32 %v879, %v1072
    %v1091 = vadd.f32 %v880, %v1074
    %v1092 = vmax.f32 %v1076, %v1084
    %v1093 = vmax.f32 %v1077, %v1085
    %v1094 = vmax.f32 %v1078, %v1086
    %v1095 = vmax.f32 %v1079, %v1087
    %v1096 = vmax.f32 %v1080, %v1088
    %v1097 = vmax.f32 %v1081, %v1089
    %v1098 = vmax.f32 %v1082, %v1090
    %v1099 = vmax.f32 %v1083, %v1091
    %v1100 = vld [vmem:[%s2] sm:$0x3]
    %v1102 = vlaneseq
    %v1103 = vshrl.u32 %v1102, 7
    %v1104 = vsub.s32 0, %v1103
    %v1105 = vrot.slane %v1100, %v1104
    %v1106 = vlaneseq
    %v1107 = vshrl.u32 %v1106, 7
    %v1108 = vsub.s32 1, %v1107
    %v1109 = vrot.slane %v1100, %v1108
    %v1112 = vadd.f32 %v1092, %v1105
    %v1113 = vadd.f32 %v1093, %v1109
    %v1114 = vadd.f32 %v1094, %v1105
    %v1115 = vadd.f32 %v1095, %v1109
    %v1116 = vadd.f32 %v1096, %v1105
    %v1117 = vadd.f32 %v1097, %v1109
    %v1118 = vadd.f32 %v1098, %v1105
    %v1119 = vadd.f32 %v1099, %v1109
    %v1120 = vmax.f32 %v1112, 0.0
    %v1121 = vmax.f32 %v1113, 0.0
    %v1122 = vmax.f32 %v1114, 0.0
    %v1123 = vmax.f32 %v1115, 0.0
    %v1124 = vmax.f32 %v1116, 0.0
    %v1125 = vmax.f32 %v1117, 0.0
    %v1126 = vmax.f32 %v1118, 0.0
    %v1127 = vmax.f32 %v1119, 0.0
    %v1128 = vmax.f32 %v1120, %v1121
    %v1129 = vmax.f32 %v1122, %v1123
    %v1130 = vmax.f32 %v1124, %v1125
    %v1131 = vmax.f32 %v1126, %v1127
    %vm1132 = vcmask 687104
    %1133 = vst.msk [vmem:[#allocation2] sm:$0xff] %vm1132, %v1128
    %1134 = vst.msk [vmem:[#allocation2 + $0x8] sm:$0xff] %vm1132, %v1129
    %1135 = vst.msk [vmem:[#allocation2 + $0x10] sm:$0xff] %vm1132, %v1130
    %vm1136 = vcmask 685056
    %1137 = vst.msk [vmem:[#allocation2 + $0x18] sm:$0x3f] %vm1136, %v1131
    %v1138 = vld [vmem:[%s3] sm:$0xff]
    %v1139 = vld [vmem:[%s3 + $0x8] sm:$0xff]
    %v1140 = vld [vmem:[%s3 + $0x10] sm:$0xff]
    %v1141 = vld [vmem:[%s3 + $0x18] sm:$0xff]
    %v1142 = vld [vmem:[%s3 + $0x20] sm:$0xff]
    %v1143 = vld [vmem:[%s3 + $0x28] sm:$0xff]
    %v1144 = vld [vmem:[%s3 + $0x30] sm:$0xff]
    %v1145 = vld [vmem:[%s3 + $0x38] sm:$0xff]
    %v1146 = vld [vmem:[%s3 + $0x40] sm:$0xff]
    %v1147 = vld [vmem:[%s3 + $0x48] sm:$0xff]
    %v1148 = vld [vmem:[%s3 + $0x50] sm:$0x33]
    %v1149 = vld [vmem:[#allocation2] ss:$2 sm:$0xff]
    %s1150 = scalar_lea.vmem [#allocation2], 16
    %v1151 = vld [vmem:[%s1150] ss:$2 sm:$0x1f]
    %v1152 = vpack.c.bf16 %v1151, %v1149
    %s1153 = scalar_lea.vmem [#allocation2], 1
    %v1154 = vld [vmem:[%s1153] ss:$2 sm:$0xff]
    %s1155 = scalar_lea.vmem [#allocation2], 17
    %v1156 = vld [vmem:[%s1155] ss:$2 sm:$0x1f]
    %v1157 = vpack.c.bf16 %v1156, %v1154
    %s1158 = scalar_lea.vmem %s3, 88
    %v1159 = vld [vmem:[%s1158] sm:$0xff]
    %v1160 = vld [vmem:[%s1158 + $0x8] sm:$0xff]
    %v1161 = vld [vmem:[%s1158 + $0x10] sm:$0xff]
    %v1162 = vld [vmem:[%s1158 + $0x18] sm:$0xff]
    %v1163 = vld [vmem:[%s1158 + $0x20] sm:$0xff]
    %v1164 = vld [vmem:[%s1158 + $0x28] sm:$0xff]
    %v1165 = vld [vmem:[%s1158 + $0x30] sm:$0xff]
    %v1166 = vld [vmem:[%s1158 + $0x38] sm:$0xff]
    %v1167 = vld [vmem:[%s1158 + $0x40] sm:$0xff]
    %v1168 = vld [vmem:[%s1158 + $0x48] sm:$0xff]
    %v1169 = vld [vmem:[%s1158 + $0x50] sm:$0x33]
    %s1170 = scalar_lea.vmem [#allocation2], 2
    %v1171 = vld [vmem:[%s1170] ss:$2 sm:$0xff]
    %s1172 = scalar_lea.vmem [#allocation2], 18
    %v1173 = vld [vmem:[%s1172] ss:$2 sm:$0x1f]
    %v1174 = vpack.c.bf16 %v1173, %v1171
    %v1186 = vunpack.c.l.b16 %v1159
    %v1187 = vunpack.c.h.b16 %v1159
    %v1188 = vunpack.c.l.b16 %v1160
    %v1189 = vunpack.c.h.b16 %v1160
    %v1190 = vunpack.c.l.b16 %v1161
    %v1191 = vunpack.c.h.b16 %v1161
    %v1192 = vunpack.c.l.b16 %v1162
    %v1193 = vunpack.c.h.b16 %v1162
    %v1194 = vunpack.c.l.b16 %v1163
    %v1195 = vunpack.c.h.b16 %v1163
    %v1196 = vunpack.c.l.b16 %v1164
    %v1197 = vunpack.c.h.b16 %v1164
    %v1198 = vunpack.c.l.b16 %v1165
    %v1199 = vunpack.c.h.b16 %v1165
    %v1200 = vunpack.c.l.b16 %v1166
    %v1201 = vunpack.c.h.b16 %v1166
    %v1202 = vunpack.c.l.b16 %v1167
    %v1203 = vunpack.c.h.b16 %v1167
    %v1204 = vunpack.c.l.b16 %v1168
    %v1205 = vunpack.c.h.b16 %v1168
    %v1206 = vunpack.c.l.b16 %v1169
    %v1207 = vunpack.c.h.b16 %v1169
    %v1208 = vpack.c.b16 %v1188, %v1186
    %v1209 = vpack.c.b16 %v1189, %v1187
    %v1210 = vpack.c.b16 %v1192, %v1190
    %v1211 = vpack.c.b16 %v1193, %v1191
    %v1212 = vpack.c.b16 %v1196, %v1194
    %v1213 = vpack.c.b16 %v1197, %v1195
    %v1214 = vpack.c.b16 %v1200, %v1198
    %v1215 = vpack.c.b16 %v1201, %v1199
    %v1216 = vpack.c.b16 %v1204, %v1202
    %v1217 = vpack.c.b16 %v1205, %v1203
    %v1218 = vpack.c.b16 %v1206, %v1206
    %v1219 = vpack.c.b16 %v1207, %v1207
    %v1231 = vsel %vm1132, %v1157, 0
    %vm1233 = vcmask 1041408
    %v1235 = vsel %vm1233, %v1218, 0
    %v1238 = vsel %vm1233, %v1219, 0
    %1240 = vmatprep.subr.bf16.mxu0 %v1209
    %1241 = vmatpush1.bf16.msra.mxu0 %v1208
    %1242 = vmatprep.subr.bf16.mxu0 %v1211
    %1243 = vmatpush1.bf16.msra.mxu0 %v1210
    %1244 = vmatprep.subr.bf16.mxu0 %v1213
    %1245 = vmatpush1.bf16.msra.mxu0 %v1212
    %1246 = vmatprep.subr.bf16.mxu0 %v1215
    %1247 = vmatpush1.bf16.msra.mxu0 %v1214
    %1248 = vmatprep.subr.bf16.mxu0 %v1217
    %1249 = vmatpush1.bf16.msra.mxu0 %v1216
    %1250 = vmatprep.subr.bf16.mxu0 %v1238
    %1251 = vmatpush1.bf16.msra.mxu0 %v1235
    %1252 = vmatprep.subr.bf16.mxu0 0
    %1253 = vmatpush1.bf16.msra.mxu0 0
    %1254 = vmatprep.subr.bf16.mxu0 0
    %1255 = vmatpush1.bf16.msra.mxu0 0
    %1256 = vmatprep.subr.bf16.mxu0 0
    %1257 = vmatpush1.bf16.msra.mxu0 0
    %1258 = vmatprep.subr.bf16.mxu0 0
    %1259 = vmatpush1.bf16.msra.mxu0 0
    %1260 = vmatprep.subr.bf16.mxu0 0
    %1261 = vmatpush1.bf16.msra.mxu0 0
    %1262 = vmatprep.subr.bf16.mxu0 0
    %1263 = vmatpush1.bf16.msra.mxu0 0
    %1264 = vmatprep.subr.bf16.mxu0 0
    %1265 = vmatpush1.bf16.msra.mxu0 0
    %1266 = vmatprep.subr.bf16.mxu0 0
    %1267 = vmatpush1.bf16.msra.mxu0 0
    %1268 = vmatprep.subr.bf16.mxu0 0
    %1269 = vmatpush1.bf16.msra.mxu0 0
    %1270 = vmatprep.subr.bf16.mxu0 0
    %1271 = vmatpush1.bf16.msra.mxu0 0
    %1272 = vmatprep.mubr.bf16.mxu0 0
    %1273 = vmatmul.mubr.bf16.gmra.mrb[0].mxu0 %v1231
    %v1274 = vpop.f32.mrb[0].mxu0
    %v1275 = vadd.f32 0.0, %v1274
    %v1276 = vpop.f32.mrb[0].mxu0
    %v1277 = vadd.f32 0.0, %v1276
    %v1278 = vpop.f32.mrb[0].mxu0
    %v1279 = vadd.f32 0.0, %v1278
    %v1280 = vpop.f32.mrb[0].mxu0
    %v1281 = vadd.f32 0.0, %v1280
    %1282 = vdwg.mxu0
    %v1284 = vsel %vm1132, %v1174, 0
    %1286 = vmatprep.subr.bf16.mxu0 %v1209
    %1287 = vmatpush1.bf16.msra.mxu0 %v1208
    %1288 = vmatprep.subr.bf16.mxu0 %v1211
    %1289 = vmatpush1.bf16.msra.mxu0 %v1210
    %1290 = vmatprep.subr.bf16.mxu0 %v1213
    %1291 = vmatpush1.bf16.msra.mxu0 %v1212
    %1292 = vmatprep.subr.bf16.mxu0 %v1215
    %1293 = vmatpush1.bf16.msra.mxu0 %v1214
    %1294 = vmatprep.subr.bf16.mxu0 %v1217
    %1295 = vmatpush1.bf16.msra.mxu0 %v1216
    %1296 = vmatprep.subr.bf16.mxu0 %v1238
    %1297 = vmatpush1.bf16.msra.mxu0 %v1235
    %1298 = vmatprep.subr.bf16.mxu0 0
    %1299 = vmatpush1.bf16.msra.mxu0 0
    %1300 = vmatprep.subr.bf16.mxu0 0
    %1301 = vmatpush1.bf16.msra.mxu0 0
    %1302 = vmatprep.subr.bf16.mxu0 0
    %1303 = vmatpush1.bf16.msra.mxu0 0
    %1304 = vmatprep.subr.bf16.mxu0 0
    %1305 = vmatpush1.bf16.msra.mxu0 0
    %1306 = vmatprep.subr.bf16.mxu0 0
    %1307 = vmatpush1.bf16.msra.mxu0 0
    %1308 = vmatprep.subr.bf16.mxu0 0
    %1309 = vmatpush1.bf16.msra.mxu0 0
    %1310 = vmatprep.subr.bf16.mxu0 0
    %1311 = vmatpush1.bf16.msra.mxu0 0
    %1312 = vmatprep.subr.bf16.mxu0 0
    %1313 = vmatpush1.bf16.msra.mxu0 0
    %1314 = vmatprep.subr.bf16.mxu0 0
    %1315 = vmatpush1.bf16.msra.mxu0 0
    %1316 = vmatprep.subr.bf16.mxu0 0
    %1317 = vmatpush1.bf16.msra.mxu0 0
    %1318 = vmatprep.mubr.bf16.mxu0 0
    %1319 = vmatmul.mubr.bf16.gmra.mrb[0].mxu0 %v1284
    %v1320 = vpop.f32.mrb[0].mxu0
    %v1321 = vadd.f32 0.0, %v1320
    %v1322 = vpop.f32.mrb[0].mxu0
    %v1323 = vadd.f32 0.0, %v1322
    %v1324 = vpop.f32.mrb[0].mxu0
    %v1325 = vadd.f32 0.0, %v1324
    %v1326 = vpop.f32.mrb[0].mxu0
    %v1327 = vadd.f32 0.0, %v1326
    %1328 = vdwg.mxu0
    %v1340 = vunpack.c.l.b16 %v1138
    %v1341 = vunpack.c.h.b16 %v1138
    %v1342 = vunpack.c.l.b16 %v1139
    %v1343 = vunpack.c.h.b16 %v1139
    %v1344 = vunpack.c.l.b16 %v1140
    %v1345 = vunpack.c.h.b16 %v1140
    %v1346 = vunpack.c.l.b16 %v1141
    %v1347 = vunpack.c.h.b16 %v1141
    %v1348 = vunpack.c.l.b16 %v1142
    %v1349 = vunpack.c.h.b16 %v1142
    %v1350 = vunpack.c.l.b16 %v1143
    %v1351 = vunpack.c.h.b16 %v1143
    %v1352 = vunpack.c.l.b16 %v1144
    %v1353 = vunpack.c.h.b16 %v1144
    %v1354 = vunpack.c.l.b16 %v1145
    %v1355 = vunpack.c.h.b16 %v1145
    %v1356 = vunpack.c.l.b16 %v1146
    %v1357 = vunpack.c.h.b16 %v1146
    %v1358 = vunpack.c.l.b16 %v1147
    %v1359 = vunpack.c.h.b16 %v1147
    %v1360 = vunpack.c.l.b16 %v1148
    %v1361 = vunpack.c.h.b16 %v1148
    %v1362 = vpack.c.b16 %v1342, %v1340
    %v1363 = vpack.c.b16 %v1343, %v1341
    %v1364 = vpack.c.b16 %v1346, %v1344
    %v1365 = vpack.c.b16 %v1347, %v1345
    %v1366 = vpack.c.b16 %v1350, %v1348
    %v1367 = vpack.c.b16 %v1351, %v1349
    %v1368 = vpack.c.b16 %v1354, %v1352
    %v1369 = vpack.c.b16 %v1355, %v1353
    %v1370 = vpack.c.b16 %v1358, %v1356
    %v1371 = vpack.c.b16 %v1359, %v1357
    %v1372 = vpack.c.b16 %v1360, %v1360
    %v1373 = vpack.c.b16 %v1361, %v1361
    %v1385 = vsel %vm1132, %v1152, 0
    %v1388 = vsel %vm1233, %v1372, 0
    %v1391 = vsel %vm1233, %v1373, 0
    %1393 = vmatprep.subr.bf16.mxu0 %v1363
    %1394 = vmatpush1.bf16.msra.mxu0 %v1362
    %1395 = vmatprep.subr.bf16.mxu0 %v1365
    %1396 = vmatpush1.bf16.msra.mxu0 %v1364
    %1397 = vmatprep.subr.bf16.mxu0 %v1367
    %1398 = vmatpush1.bf16.msra.mxu0 %v1366
    %1399 = vmatprep.subr.bf16.mxu0 %v1369
    %1400 = vmatpush1.bf16.msra.mxu0 %v1368
    %1401 = vmatprep.subr.bf16.mxu0 %v1371
    %1402 = vmatpush1.bf16.msra.mxu0 %v1370
    %1403 = vmatprep.subr.bf16.mxu0 %v1391
    %1404 = vmatpush1.bf16.msra.mxu0 %v1388
    %1405 = vmatprep.subr.bf16.mxu0 0
    %1406 = vmatpush1.bf16.msra.mxu0 0
    %1407 = vmatprep.subr.bf16.mxu0 0
    %1408 = vmatpush1.bf16.msra.mxu0 0
    %1409 = vmatprep.subr.bf16.mxu0 0
    %1410 = vmatpush1.bf16.msra.mxu0 0
    %1411 = vmatprep.subr.bf16.mxu0 0
    %1412 = vmatpush1.bf16.msra.mxu0 0
    %1413 = vmatprep.subr.bf16.mxu0 0
    %1414 = vmatpush1.bf16.msra.mxu0 0
    %1415 = vmatprep.subr.bf16.mxu0 0
    %1416 = vmatpush1.bf16.msra.mxu0 0
    %1417 = vmatprep.subr.bf16.mxu0 0
    %1418 = vmatpush1.bf16.msra.mxu0 0
    %1419 = vmatprep.subr.bf16.mxu0 0
    %1420 = vmatpush1.bf16.msra.mxu0 0
    %1421 = vmatprep.subr.bf16.mxu0 0
    %1422 = vmatpush1.bf16.msra.mxu0 0
    %1423 = vmatprep.subr.bf16.mxu0 0
    %1424 = vmatpush1.bf16.msra.mxu0 0
    %1425 = vmatprep.mubr.bf16.mxu0 0
    %1426 = vmatmul.mubr.bf16.gmra.mrb[0].mxu0 %v1385
    %v1427 = vpop.f32.mrb[0].mxu0
    %v1428 = vadd.f32 %v1275, %v1427
    %v1429 = vpop.f32.mrb[0].mxu0
    %v1430 = vadd.f32 %v1277, %v1429
    %v1431 = vpop.f32.mrb[0].mxu0
    %v1432 = vadd.f32 %v1279, %v1431
    %v1433 = vpop.f32.mrb[0].mxu0
    %v1434 = vadd.f32 %v1281, %v1433
    %1435 = vdwg.mxu0
    %1436 = vmatprep.subr.bf16.mxu0 %v1363
    %1437 = vmatpush1.bf16.msra.mxu0 %v1362
    %1438 = vmatprep.subr.bf16.mxu0 %v1365
    %1439 = vmatpush1.bf16.msra.mxu0 %v1364
    %1440 = vmatprep.subr.bf16.mxu0 %v1367
    %1441 = vmatpush1.bf16.msra.mxu0 %v1366
    %1442 = vmatprep.subr.bf16.mxu0 %v1369
    %1443 = vmatpush1.bf16.msra.mxu0 %v1368
    %1444 = vmatprep.subr.bf16.mxu0 %v1371
    %1445 = vmatpush1.bf16.msra.mxu0 %v1370
    %1446 = vmatprep.subr.bf16.mxu0 %v1391
    %1447 = vmatpush1.bf16.msra.mxu0 %v1388
    %1448 = vmatprep.subr.bf16.mxu0 0
    %1449 = vmatpush1.bf16.msra.mxu0 0
    %1450 = vmatprep.subr.bf16.mxu0 0
    %1451 = vmatpush1.bf16.msra.mxu0 0
    %1452 = vmatprep.subr.bf16.mxu0 0
    %1453 = vmatpush1.bf16.msra.mxu0 0
    %1454 = vmatprep.subr.bf16.mxu0 0
    %1455 = vmatpush1.bf16.msra.mxu0 0
    %1456 = vmatprep.subr.bf16.mxu0 0
    %1457 = vmatpush1.bf16.msra.mxu0 0
    %1458 = vmatprep.subr.bf16.mxu0 0
    %1459 = vmatpush1.bf16.msra.mxu0 0
    %1460 = vmatprep.subr.bf16.mxu0 0
    %1461 = vmatpush1.bf16.msra.mxu0 0
    %1462 = vmatprep.subr.bf16.mxu0 0
    %1463 = vmatpush1.bf16.msra.mxu0 0
    %1464 = vmatprep.subr.bf16.mxu0 0
    %1465 = vmatpush1.bf16.msra.mxu0 0
    %1466 = vmatprep.subr.bf16.mxu0 0
    %1467 = vmatpush1.bf16.msra.mxu0 0
    %1468 = vmatprep.mubr.bf16.mxu0 0
    %1469 = vmatmul.mubr.bf16.gmra.mrb[0].mxu0 %v1231
    %v1470 = vpop.f32.mrb[0].mxu0
    %v1471 = vadd.f32 %v1321, %v1470
    %v1472 = vpop.f32.mrb[0].mxu0
    %v1473 = vadd.f32 %v1323, %v1472
    %v1474 = vpop.f32.mrb[0].mxu0
    %v1475 = vadd.f32 %v1325, %v1474
    %v1476 = vpop.f32.mrb[0].mxu0
    %v1477 = vadd.f32 %v1327, %v1476
    %1478 = vdwg.mxu0
    %s1479 = scalar_lea.vmem %s3, 176
    %v1480 = vld [vmem:[%s1479] sm:$0xff]
    %v1481 = vld [vmem:[%s1479 + $0x8] sm:$0xff]
    %v1482 = vld [vmem:[%s1479 + $0x10] sm:$0xff]
    %v1483 = vld [vmem:[%s1479 + $0x18] sm:$0xff]
    %v1484 = vld [vmem:[%s1479 + $0x20] sm:$0xff]
    %v1485 = vld [vmem:[%s1479 + $0x28] sm:$0xff]
    %v1486 = vld [vmem:[%s1479 + $0x30] sm:$0xff]
    %v1487 = vld [vmem:[%s1479 + $0x38] sm:$0xff]
    %v1488 = vld [vmem:[%s1479 + $0x40] sm:$0xff]
    %v1489 = vld [vmem:[%s1479 + $0x48] sm:$0xff]
    %v1490 = vld [vmem:[%s1479 + $0x50] sm:$0x33]
    %s1491 = scalar_lea.vmem [#allocation2], 3
    %v1492 = vld [vmem:[%s1491] ss:$2 sm:$0xff]
    %s1493 = scalar_lea.vmem [#allocation2], 19
    %v1494 = vld [vmem:[%s1493] ss:$2 sm:$0x1f]
    %v1495 = vpack.c.bf16 %v1494, %v1492
    %v1507 = vunpack.c.l.b16 %v1480
    %v1508 = vunpack.c.h.b16 %v1480
    %v1509 = vunpack.c.l.b16 %v1481
    %v1510 = vunpack.c.h.b16 %v1481
    %v1511 = vunpack.c.l.b16 %v1482
    %v1512 = vunpack.c.h.b16 %v1482
    %v1513 = vunpack.c.l.b16 %v1483
    %v1514 = vunpack.c.h.b16 %v1483
    %v1515 = vunpack.c.l.b16 %v1484
    %v1516 = vunpack.c.h.b16 %v1484
    %v1517 = vunpack.c.l.b16 %v1485
    %v1518 = vunpack.c.h.b16 %v1485
    %v1519 = vunpack.c.l.b16 %v1486
    %v1520 = vunpack.c.h.b16 %v1486
    %v1521 = vunpack.c.l.b16 %v1487
    %v1522 = vunpack.c.h.b16 %v1487
    %v1523 = vunpack.c.l.b16 %v1488
    %v1524 = vunpack.c.h.b16 %v1488
    %v1525 = vunpack.c.l.b16 %v1489
    %v1526 = vunpack.c.h.b16 %v1489
    %v1527 = vunpack.c.l.b16 %v1490
    %v1528 = vunpack.c.h.b16 %v1490
    %v1529 = vpack.c.b16 %v1509, %v1507
    %v1530 = vpack.c.b16 %v1510, %v1508
    %v1531 = vpack.c.b16 %v1513, %v1511
    %v1532 = vpack.c.b16 %v1514, %v1512
    %v1533 = vpack.c.b16 %v1517, %v1515
    %v1534 = vpack.c.b16 %v1518, %v1516
    %v1535 = vpack.c.b16 %v1521, %v1519
    %v1536 = vpack.c.b16 %v1522, %v1520
    %v1537 = vpack.c.b16 %v1525, %v1523
    %v1538 = vpack.c.b16 %v1526, %v1524
    %v1539 = vpack.c.b16 %v1527, %v1527
    %v1540 = vpack.c.b16 %v1528, %v1528
    %v1552 = vsel %vm1233, %v1539, 0
    %v1555 = vsel %vm1233, %v1540, 0
    %1557 = vmatprep.subr.bf16.mxu0 %v1530
    %1558 = vmatpush1.bf16.msra.mxu0 %v1529
    %1559 = vmatprep.subr.bf16.mxu0 %v1532
    %1560 = vmatpush1.bf16.msra.mxu0 %v1531
    %1561 = vmatprep.subr.bf16.mxu0 %v1534
    %1562 = vmatpush1.bf16.msra.mxu0 %v1533
    %1563 = vmatprep.subr.bf16.mxu0 %v1536
    %1564 = vmatpush1.bf16.msra.mxu0 %v1535
    %1565 = vmatprep.subr.bf16.mxu0 %v1538
    %1566 = vmatpush1.bf16.msra.mxu0 %v1537
    %1567 = vmatprep.subr.bf16.mxu0 %v1555
    %1568 = vmatpush1.bf16.msra.mxu0 %v1552
    %1569 = vmatprep.subr.bf16.mxu0 0
    %1570 = vmatpush1.bf16.msra.mxu0 0
    %1571 = vmatprep.subr.bf16.mxu0 0
    %1572 = vmatpush1.bf16.msra.mxu0 0
    %1573 = vmatprep.subr.bf16.mxu0 0
    %1574 = vmatpush1.bf16.msra.mxu0 0
    %1575 = vmatprep.subr.bf16.mxu0 0
    %1576 = vmatpush1.bf16.msra.mxu0 0
    %1577 = vmatprep.subr.bf16.mxu0 0
    %1578 = vmatpush1.bf16.msra.mxu0 0
    %1579 = vmatprep.subr.bf16.mxu0 0
    %1580 = vmatpush1.bf16.msra.mxu0 0
    %1581 = vmatprep.subr.bf16.mxu0 0
    %1582 = vmatpush1.bf16.msra.mxu0 0
    %1583 = vmatprep.subr.bf16.mxu0 0
    %1584 = vmatpush1.bf16.msra.mxu0 0
    %1585 = vmatprep.subr.bf16.mxu0 0
    %1586 = vmatpush1.bf16.msra.mxu0 0
    %1587 = vmatprep.subr.bf16.mxu0 0
    %1588 = vmatpush1.bf16.msra.mxu0 0
    %1589 = vmatprep.mubr.bf16.mxu0 0
    %1590 = vmatmul.mubr.bf16.gmra.mrb[0].mxu0 %v1284
    %v1591 = vpop.f32.mrb[0].mxu0
    %v1592 = vadd.f32 0.0, %v1591
    %v1593 = vpop.f32.mrb[0].mxu0
    %v1594 = vadd.f32 0.0, %v1593
    %v1595 = vpop.f32.mrb[0].mxu0
    %v1596 = vadd.f32 0.0, %v1595
    %v1597 = vpop.f32.mrb[0].mxu0
    %v1598 = vadd.f32 0.0, %v1597
    %1599 = vdwg.mxu0
    %v1601 = vsel %vm1132, %v1495, 0
    %1603 = vmatprep.subr.bf16.mxu0 %v1530
    %1604 = vmatpush1.bf16.msra.mxu0 %v1529
    %1605 = vmatprep.subr.bf16.mxu0 %v1532
    %1606 = vmatpush1.bf16.msra.mxu0 %v1531
    %1607 = vmatprep.subr.bf16.mxu0 %v1534
    %1608 = vmatpush1.bf16.msra.mxu0 %v1533
    %1609 = vmatprep.subr.bf16.mxu0 %v1536
    %1610 = vmatpush1.bf16.msra.mxu0 %v1535
    %1611 = vmatprep.subr.bf16.mxu0 %v1538
    %1612 = vmatpush1.bf16.msra.mxu0 %v1537
    %1613 = vmatprep.subr.bf16.mxu0 %v1555
    %1614 = vmatpush1.bf16.msra.mxu0 %v1552
    %1615 = vmatprep.subr.bf16.mxu0 0
    %1616 = vmatpush1.bf16.msra.mxu0 0
    %1617 = vmatprep.subr.bf16.mxu0 0
    %1618 = vmatpush1.bf16.msra.mxu0 0
    %1619 = vmatprep.subr.bf16.mxu0 0
    %1620 = vmatpush1.bf16.msra.mxu0 0
    %1621 = vmatprep.subr.bf16.mxu0 0
    %1622 = vmatpush1.bf16.msra.mxu0 0
    %1623 = vmatprep.subr.bf16.mxu0 0
    %1624 = vmatpush1.bf16.msra.mxu0 0
    %1625 = vmatprep.subr.bf16.mxu0 0
    %1626 = vmatpush1.bf16.msra.mxu0 0
    %1627 = vmatprep.subr.bf16.mxu0 0
    %1628 = vmatpush1.bf16.msra.mxu0 0
    %1629 = vmatprep.subr.bf16.mxu0 0
    %1630 = vmatpush1.bf16.msra.mxu0 0
    %1631 = vmatprep.subr.bf16.mxu0 0
    %1632 = vmatpush1.bf16.msra.mxu0 0
    %1633 = vmatprep.subr.bf16.mxu0 0
    %1634 = vmatpush1.bf16.msra.mxu0 0
    %1635 = vmatprep.mubr.bf16.mxu0 0
    %1636 = vmatmul.mubr.bf16.gmra.mrb[0].mxu0 %v1601
    %v1637 = vpop.f32.mrb[0].mxu0
    %v1638 = vadd.f32 0.0, %v1637
    %v1639 = vpop.f32.mrb[0].mxu0
    %v1640 = vadd.f32 0.0, %v1639
    %v1641 = vpop.f32.mrb[0].mxu0
    %v1642 = vadd.f32 0.0, %v1641
    %v1643 = vpop.f32.mrb[0].mxu0
    %v1644 = vadd.f32 0.0, %v1643
    %1645 = vdwg.mxu0
    %v1646 = vadd.f32 %v1428, %v1592
    %v1647 = vadd.f32 %v1430, %v1594
    %v1648 = vadd.f32 %v1432, %v1596
    %v1649 = vadd.f32 %v1434, %v1598
    %v1650 = vadd.f32 %v1471, %v1638
    %v1651 = vadd.f32 %v1473, %v1640
    %v1652 = vadd.f32 %v1475, %v1642
    %v1653 = vadd.f32 %v1477, %v1644
    %s1654 = scalar_lea.vmem %s3, 264
    %v1655 = vld [vmem:[%s1654] sm:$0xff]
    %v1656 = vld [vmem:[%s1654 + $0x8] sm:$0xff]
    %v1657 = vld [vmem:[%s1654 + $0x10] sm:$0xff]
    %v1658 = vld [vmem:[%s1654 + $0x18] sm:$0xff]
    %v1659 = vld [vmem:[%s1654 + $0x20] sm:$0xff]
    %v1660 = vld [vmem:[%s1654 + $0x28] sm:$0xff]
    %v1661 = vld [vmem:[%s1654 + $0x30] sm:$0xff]
    %v1662 = vld [vmem:[%s1654 + $0x38] sm:$0xff]
    %v1663 = vld [vmem:[%s1654 + $0x40] sm:$0xff]
    %v1664 = vld [vmem:[%s1654 + $0x48] sm:$0xff]
    %v1665 = vld [vmem:[%s1654 + $0x50] sm:$0x33]
    %s1666 = scalar_lea.vmem [#allocation2], 4
    %v1667 = vld [vmem:[%s1666] ss:$2 sm:$0xff]
    %s1668 = scalar_lea.vmem [#allocation2], 20
    %v1669 = vld [vmem:[%s1668] ss:$2 sm:$0x1f]
    %v1670 = vpack.c.bf16 %v1669, %v1667
    %v1682 = vunpack.c.l.b16 %v1655
    %v1683 = vunpack.c.h.b16 %v1655
    %v1684 = vunpack.c.l.b16 %v1656
    %v1685 = vunpack.c.h.b16 %v1656
    %v1686 = vunpack.c.l.b16 %v1657
    %v1687 = vunpack.c.h.b16 %v1657
    %v1688 = vunpack.c.l.b16 %v1658
    %v1689 = vunpack.c.h.b16 %v1658
    %v1690 = vunpack.c.l.b16 %v1659
    %v1691 = vunpack.c.h.b16 %v1659
    %v1692 = vunpack.c.l.b16 %v1660
    %v1693 = vunpack.c.h.b16 %v1660
    %v1694 = vunpack.c.l.b16 %v1661
    %v1695 = vunpack.c.h.b16 %v1661
    %v1696 = vunpack.c.l.b16 %v1662
    %v1697 = vunpack.c.h.b16 %v1662
    %v1698 = vunpack.c.l.b16 %v1663
    %v1699 = vunpack.c.h.b16 %v1663
    %v1700 = vunpack.c.l.b16 %v1664
    %v1701 = vunpack.c.h.b16 %v1664
    %v1702 = vunpack.c.l.b16 %v1665
    %v1703 = vunpack.c.h.b16 %v1665
    %v1704 = vpack.c.b16 %v1684, %v1682
    %v1705 = vpack.c.b16 %v1685, %v1683
    %v1706 = vpack.c.b16 %v1688, %v1686
    %v1707 = vpack.c.b16 %v1689, %v1687
    %v1708 = vpack.c.b16 %v1692, %v1690
    %v1709 = vpack.c.b16 %v1693, %v1691
    %v1710 = vpack.c.b16 %v1696, %v1694
    %v1711 = vpack.c.b16 %v1697, %v1695
    %v1712 = vpack.c.b16 %v1700, %v1698
    %v1713 = vpack.c.b16 %v1701, %v1699
    %v1714 = vpack.c.b16 %v1702, %v1702
    %v1715 = vpack.c.b16 %v1703, %v1703
    %v1727 = vsel %vm1233, %v1714, 0
    %v1730 = vsel %vm1233, %v1715, 0
    %1732 = vmatprep.subr.bf16.mxu0 %v1705
    %1733 = vmatpush1.bf16.msra.mxu0 %v1704
    %1734 = vmatprep.subr.bf16.mxu0 %v1707
    %1735 = vmatpush1.bf16.msra.mxu0 %v1706
    %1736 = vmatprep.subr.bf16.mxu0 %v1709
    %1737 = vmatpush1.bf16.msra.mxu0 %v1708
    %1738 = vmatprep.subr.bf16.mxu0 %v1711
    %1739 = vmatpush1.bf16.msra.mxu0 %v1710
    %1740 = vmatprep.subr.bf16.mxu0 %v1713
    %1741 = vmatpush1.bf16.msra.mxu0 %v1712
    %1742 = vmatprep.subr.bf16.mxu0 %v1730
    %1743 = vmatpush1.bf16.msra.mxu0 %v1727
    %1744 = vmatprep.subr.bf16.mxu0 0
    %1745 = vmatpush1.bf16.msra.mxu0 0
    %1746 = vmatprep.subr.bf16.mxu0 0
    %1747 = vmatpush1.bf16.msra.mxu0 0
    %1748 = vmatprep.subr.bf16.mxu0 0
    %1749 = vmatpush1.bf16.msra.mxu0 0
    %1750 = vmatprep.subr.bf16.mxu0 0
    %1751 = vmatpush1.bf16.msra.mxu0 0
    %1752 = vmatprep.subr.bf16.mxu0 0
    %1753 = vmatpush1.bf16.msra.mxu0 0
    %1754 = vmatprep.subr.bf16.mxu0 0
    %1755 = vmatpush1.bf16.msra.mxu0 0
    %1756 = vmatprep.subr.bf16.mxu0 0
    %1757 = vmatpush1.bf16.msra.mxu0 0
    %1758 = vmatprep.subr.bf16.mxu0 0
    %1759 = vmatpush1.bf16.msra.mxu0 0
    %1760 = vmatprep.subr.bf16.mxu0 0
    %1761 = vmatpush1.bf16.msra.mxu0 0
    %1762 = vmatprep.subr.bf16.mxu0 0
    %1763 = vmatpush1.bf16.msra.mxu0 0
    %1764 = vmatprep.mubr.bf16.mxu0 0
    %1765 = vmatmul.mubr.bf16.gmra.mrb[0].mxu0 %v1601
    %v1766 = vpop.f32.mrb[0].mxu0
    %v1767 = vadd.f32 0.0, %v1766
    %v1768 = vpop.f32.mrb[0].mxu0
    %v1769 = vadd.f32 0.0, %v1768
    %v1770 = vpop.f32.mrb[0].mxu0
    %v1771 = vadd.f32 0.0, %v1770
    %v1772 = vpop.f32.mrb[0].mxu0
    %v1773 = vadd.f32 0.0, %v1772
    %1774 = vdwg.mxu0
    %v1776 = vsel %vm1132, %v1670, 0
    %1778 = vmatprep.subr.bf16.mxu0 %v1705
    %1779 = vmatpush1.bf16.msra.mxu0 %v1704
    %1780 = vmatprep.subr.bf16.mxu0 %v1707
    %1781 = vmatpush1.bf16.msra.mxu0 %v1706
    %1782 = vmatprep.subr.bf16.mxu0 %v1709
    %1783 = vmatpush1.bf16.msra.mxu0 %v1708
    %1784 = vmatprep.subr.bf16.mxu0 %v1711
    %1785 = vmatpush1.bf16.msra.mxu0 %v1710
    %1786 = vmatprep.subr.bf16.mxu0 %v1713
    %1787 = vmatpush1.bf16.msra.mxu0 %v1712
    %1788 = vmatprep.subr.bf16.mxu0 %v1730
    %1789 = vmatpush1.bf16.msra.mxu0 %v1727
    %1790 = vmatprep.subr.bf16.mxu0 0
    %1791 = vmatpush1.bf16.msra.mxu0 0
    %1792 = vmatprep.subr.bf16.mxu0 0
    %1793 = vmatpush1.bf16.msra.mxu0 0
    %1794 = vmatprep.subr.bf16.mxu0 0
    %1795 = vmatpush1.bf16.msra.mxu0 0
    %1796 = vmatprep.subr.bf16.mxu0 0
    %1797 = vmatpush1.bf16.msra.mxu0 0
    %1798 = vmatprep.subr.bf16.mxu0 0
    %1799 = vmatpush1.bf16.msra.mxu0 0
    %1800 = vmatprep.subr.bf16.mxu0 0
    %1801 = vmatpush1.bf16.msra.mxu0 0
    %1802 = vmatprep.subr.bf16.mxu0 0
    %1803 = vmatpush1.bf16.msra.mxu0 0
    %1804 = vmatprep.subr.bf16.mxu0 0
    %1805 = vmatpush1.bf16.msra.mxu0 0
    %1806 = vmatprep.subr.bf16.mxu0 0
    %1807 = vmatpush1.bf16.msra.mxu0 0
    %1808 = vmatprep.subr.bf16.mxu0 0
    %1809 = vmatpush1.bf16.msra.mxu0 0
    %1810 = vmatprep.mubr.bf16.mxu0 0
    %1811 = vmatmul.mubr.bf16.gmra.mrb[0].mxu0 %v1776
    %v1812 = vpop.f32.mrb[0].mxu0
    %v1813 = vadd.f32 0.0, %v1812
    %v1814 = vpop.f32.mrb[0].mxu0
    %v1815 = vadd.f32 0.0, %v1814
    %v1816 = vpop.f32.mrb[0].mxu0
    %v1817 = vadd.f32 0.0, %v1816
    %v1818 = vpop.f32.mrb[0].mxu0
    %v1819 = vadd.f32 0.0, %v1818
    %1820 = vdwg.mxu0
    %v1821 = vadd.f32 %v1646, %v1767
    %v1822 = vadd.f32 %v1647, %v1769
    %v1823 = vadd.f32 %v1648, %v1771
    %v1824 = vadd.f32 %v1649, %v1773
    %v1825 = vadd.f32 %v1650, %v1813
    %v1826 = vadd.f32 %v1651, %v1815
    %v1827 = vadd.f32 %v1652, %v1817
    %v1828 = vadd.f32 %v1653, %v1819
    %s1829 = scalar_lea.vmem %s3, 352
    %v1830 = vld [vmem:[%s1829] sm:$0xff]
    %v1831 = vld [vmem:[%s1829 + $0x8] sm:$0xff]
    %v1832 = vld [vmem:[%s1829 + $0x10] sm:$0xff]
    %v1833 = vld [vmem:[%s1829 + $0x18] sm:$0xff]
    %v1834 = vld [vmem:[%s1829 + $0x20] sm:$0xff]
    %v1835 = vld [vmem:[%s1829 + $0x28] sm:$0xff]
    %v1836 = vld [vmem:[%s1829 + $0x30] sm:$0xff]
    %v1837 = vld [vmem:[%s1829 + $0x38] sm:$0xff]
    %v1838 = vld [vmem:[%s1829 + $0x40] sm:$0xff]
    %v1839 = vld [vmem:[%s1829 + $0x48] sm:$0xff]
    %v1840 = vld [vmem:[%s1829 + $0x50] sm:$0x33]
    %s1841 = scalar_lea.vmem [#allocation2], 5
    %v1842 = vld [vmem:[%s1841] ss:$2 sm:$0xff]
    %s1843 = scalar_lea.vmem [#allocation2], 21
    %v1844 = vld [vmem:[%s1843] ss:$2 sm:$0x1f]
    %v1845 = vpack.c.bf16 %v1844, %v1842
    %v1857 = vunpack.c.l.b16 %v1830
    %v1858 = vunpack.c.h.b16 %v1830
    %v1859 = vunpack.c.l.b16 %v1831
    %v1860 = vunpack.c.h.b16 %v1831
    %v1861 = vunpack.c.l.b16 %v1832
    %v1862 = vunpack.c.h.b16 %v1832
    %v1863 = vunpack.c.l.b16 %v1833
    %v1864 = vunpack.c.h.b16 %v1833
    %v1865 = vunpack.c.l.b16 %v1834
    %v1866 = vunpack.c.h.b16 %v1834
    %v1867 = vunpack.c.l.b16 %v1835
    %v1868 = vunpack.c.h.b16 %v1835
    %v1869 = vunpack.c.l.b16 %v1836
    %v1870 = vunpack.c.h.b16 %v1836
    %v1871 = vunpack.c.l.b16 %v1837
    %v1872 = vunpack.c.h.b16 %v1837
    %v1873 = vunpack.c.l.b16 %v1838
    %v1874 = vunpack.c.h.b16 %v1838
    %v1875 = vunpack.c.l.b16 %v1839
    %v1876 = vunpack.c.h.b16 %v1839
    %v1877 = vunpack.c.l.b16 %v1840
    %v1878 = vunpack.c.h.b16 %v1840
    %v1879 = vpack.c.b16 %v1859, %v1857
    %v1880 = vpack.c.b16 %v1860, %v1858
    %v1881 = vpack.c.b16 %v1863, %v1861
    %v1882 = vpack.c.b16 %v1864, %v1862
    %v1883 = vpack.c.b16 %v1867, %v1865
    %v1884 = vpack.c.b16 %v1868, %v1866
    %v1885 = vpack.c.b16 %v1871, %v1869
    %v1886 = vpack.c.b16 %v1872, %v1870
    %v1887 = vpack.c.b16 %v1875, %v1873
    %v1888 = vpack.c.b16 %v1876, %v1874
    %v1889 = vpack.c.b16 %v1877, %v1877
    %v1890 = vpack.c.b16 %v1878, %v1878
    %v1902 = vsel %vm1233, %v1889, 0
    %v1905 = vsel %vm1233, %v1890, 0
    %1907 = vmatprep.subr.bf16.mxu0 %v1880
    %1908 = vmatpush1.bf16.msra.mxu0 %v1879
    %1909 = vmatprep.subr.bf16.mxu0 %v1882
    %1910 = vmatpush1.bf16.msra.mxu0 %v1881
    %1911 = vmatprep.subr.bf16.mxu0 %v1884
    %1912 = vmatpush1.bf16.msra.mxu0 %v1883
    %1913 = vmatprep.subr.bf16.mxu0 %v1886
    %1914 = vmatpush1.bf16.msra.mxu0 %v1885
    %1915 = vmatprep.subr.bf16.mxu0 %v1888
    %1916 = vmatpush1.bf16.msra.mxu0 %v1887
    %1917 = vmatprep.subr.bf16.mxu0 %v1905
    %1918 = vmatpush1.bf16.msra.mxu0 %v1902
    %1919 = vmatprep.subr.bf16.mxu0 0
    %1920 = vmatpush1.bf16.msra.mxu0 0
    %1921 = vmatprep.subr.bf16.mxu0 0
    %1922 = vmatpush1.bf16.msra.mxu0 0
    %1923 = vmatprep.subr.bf16.mxu0 0
    %1924 = vmatpush1.bf16.msra.mxu0 0
    %1925 = vmatprep.subr.bf16.mxu0 0
    %1926 = vmatpush1.bf16.msra.mxu0 0
    %1927 = vmatprep.subr.bf16.mxu0 0
    %1928 = vmatpush1.bf16.msra.mxu0 0
    %1929 = vmatprep.subr.bf16.mxu0 0
    %1930 = vmatpush1.bf16.msra.mxu0 0
    %1931 = vmatprep.subr.bf16.mxu0 0
    %1932 = vmatpush1.bf16.msra.mxu0 0
    %1933 = vmatprep.subr.bf16.mxu0 0
    %1934 = vmatpush1.bf16.msra.mxu0 0
    %1935 = vmatprep.subr.bf16.mxu0 0
    %1936 = vmatpush1.bf16.msra.mxu0 0
    %1937 = vmatprep.subr.bf16.mxu0 0
    %1938 = vmatpush1.bf16.msra.mxu0 0
    %1939 = vmatprep.mubr.bf16.mxu0 0
    %1940 = vmatmul.mubr.bf16.gmra.mrb[0].mxu0 %v1776
    %v1941 = vpop.f32.mrb[0].mxu0
    %v1942 = vadd.f32 0.0, %v1941
    %v1943 = vpop.f32.mrb[0].mxu0
    %v1944 = vadd.f32 0.0, %v1943
    %v1945 = vpop.f32.mrb[0].mxu0
    %v1946 = vadd.f32 0.0, %v1945
    %v1947 = vpop.f32.mrb[0].mxu0
    %v1948 = vadd.f32 0.0, %v1947
    %1949 = vdwg.mxu0
    %v1951 = vsel %vm1132, %v1845, 0
    %1953 = vmatprep.subr.bf16.mxu0 %v1880
    %1954 = vmatpush1.bf16.msra.mxu0 %v1879
    %1955 = vmatprep.subr.bf16.mxu0 %v1882
    %1956 = vmatpush1.bf16.msra.mxu0 %v1881
    %1957 = vmatprep.subr.bf16.mxu0 %v1884
    %1958 = vmatpush1.bf16.msra.mxu0 %v1883
    %1959 = vmatprep.subr.bf16.mxu0 %v1886
    %1960 = vmatpush1.bf16.msra.mxu0 %v1885
    %1961 = vmatprep.subr.bf16.mxu0 %v1888
    %1962 = vmatpush1.bf16.msra.mxu0 %v1887
    %1963 = vmatprep.subr.bf16.mxu0 %v1905
    %1964 = vmatpush1.bf16.msra.mxu0 %v1902
    %1965 = vmatprep.subr.bf16.mxu0 0
    %1966 = vmatpush1.bf16.msra.mxu0 0
    %1967 = vmatprep.subr.bf16.mxu0 0
    %1968 = vmatpush1.bf16.msra.mxu0 0
    %1969 = vmatprep.subr.bf16.mxu0 0
    %1970 = vmatpush1.bf16.msra.mxu0 0
    %1971 = vmatprep.subr.bf16.mxu0 0
    %1972 = vmatpush1.bf16.msra.mxu0 0
    %1973 = vmatprep.subr.bf16.mxu0 0
    %1974 = vmatpush1.bf16.msra.mxu0 0
    %1975 = vmatprep.subr.bf16.mxu0 0
    %1976 = vmatpush1.bf16.msra.mxu0 0
    %1977 = vmatprep.subr.bf16.mxu0 0
    %1978 = vmatpush1.bf16.msra.mxu0 0
    %1979 = vmatprep.subr.bf16.mxu0 0
    %1980 = vmatpush1.bf16.msra.mxu0 0
    %1981 = vmatprep.subr.bf16.mxu0 0
    %1982 = vmatpush1.bf16.msra.mxu0 0
    %1983 = vmatprep.subr.bf16.mxu0 0
    %1984 = vmatpush1.bf16.msra.mxu0 0
    %1985 = vmatprep.mubr.bf16.mxu0 0
    %1986 = vmatmul.mubr.bf16.gmra.mrb[0].mxu0 %v1951
    %v1987 = vpop.f32.mrb[0].mxu0
    %v1988 = vadd.f32 0.0, %v1987
    %v1989 = vpop.f32.mrb[0].mxu0
    %v1990 = vadd.f32 0.0, %v1989
    %v1991 = vpop.f32.mrb[0].mxu0
    %v1992 = vadd.f32 0.0, %v1991
    %v1993 = vpop.f32.mrb[0].mxu0
    %v1994 = vadd.f32 0.0, %v1993
    %1995 = vdwg.mxu0
    %v1996 = vadd.f32 %v1821, %v1942
    %v1997 = vadd.f32 %v1822, %v1944
    %v1998 = vadd.f32 %v1823, %v1946
    %v1999 = vadd.f32 %v1824, %v1948
    %v2000 = vadd.f32 %v1825, %v1988
    %v2001 = vadd.f32 %v1826, %v1990
    %v2002 = vadd.f32 %v1827, %v1992
    %v2003 = vadd.f32 %v1828, %v1994
    %v2004 = vmax.f32 %v1996, %v2000
    %v2005 = vmax.f32 %v1997, %v2001
    %v2006 = vmax.f32 %v1998, %v2002
    %v2007 = vmax.f32 %v1999, %v2003
    %v2008 = vld [vmem:[%s4] sm:$0x3]
    %v2010 = vlaneseq
    %v2011 = vshrl.u32 %v2010, 7
    %v2012 = vsub.s32 0, %v2011
    %v2013 = vrot.slane %v2008, %v2012
    %v2014 = vlaneseq
    %v2015 = vshrl.u32 %v2014, 7
    %v2016 = vsub.s32 1, %v2015
    %v2017 = vrot.slane %v2008, %v2016
    %v2020 = vadd.f32 %v2004, %v2013
    %v2021 = vadd.f32 %v2005, %v2017
    %v2022 = vadd.f32 %v2006, %v2013
    %v2023 = vadd.f32 %v2007, %v2017
    %v2024 = vmax.f32 %v2020, 0.0
    %v2025 = vmax.f32 %v2021, 0.0
    %v2026 = vmax.f32 %v2022, 0.0
    %v2027 = vmax.f32 %v2023, 0.0
    %v2028 = vmax.f32 %v2024, %v2025
    %v2029 = vmax.f32 %v2026, %v2027
    %vm2030 = vcmask 654336
    %2031 = vst.msk [vmem:[#allocation3] sm:$0xff] %vm2030, %v2028
    %vm2032 = vcmask 651264
    %2033 = vst.msk [vmem:[#allocation3 + $0x8] sm:$0x1f] %vm2032, %v2029
    %v2034 = vld [vmem:[#allocation3] ss:$8 sm:$0x3]
    %v2035 = vpack.c.bf16 %v2034, %v2034
    %v2036 = vld [vmem:[#allocation4] sm:$0xf]
    %v2037 = vld [vmem:[#allocation4 + $0x4] sm:$0xf]
    %v2038 = vld [vmem:[#allocation4 + $0x8] sm:$0xf]
    %v2039 = vld [vmem:[#allocation4 + $0xc] sm:$0xf]
    %v2040 = vld [vmem:[#allocation4 + $0x10] sm:$0xf]
    %v2041 = vld [vmem:[#allocation4 + $0x14] sm:$0xf]
    %v2042 = vld [vmem:[#allocation4 + $0x18] sm:$0xf]
    %v2043 = vld [vmem:[#allocation4 + $0x1c] sm:$0xf]
    %v2044 = vld [vmem:[#allocation4 + $0x20] sm:$0xf]
    %v2045 = vld [vmem:[#allocation4 + $0x24] sm:$0xf]
    %s2046 = scalar_lea.vmem [#allocation3], 1
    %v2047 = vld [vmem:[%s2046] ss:$8 sm:$0x3]
    %v2048 = vpack.c.bf16 %v2047, %v2047
    %s2049 = scalar_lea.vmem [#allocation4], 40
    %v2050 = vld [vmem:[%s2049] sm:$0xf]
    %v2051 = vld [vmem:[%s2049 + $0x4] sm:$0xf]
    %v2052 = vld [vmem:[%s2049 + $0x8] sm:$0xf]
    %v2053 = vld [vmem:[%s2049 + $0xc] sm:$0xf]
    %v2054 = vld [vmem:[%s2049 + $0x10] sm:$0xf]
    %v2055 = vld [vmem:[%s2049 + $0x14] sm:$0xf]
    %v2056 = vld [vmem:[%s2049 + $0x18] sm:$0xf]
    %v2057 = vld [vmem:[%s2049 + $0x1c] sm:$0xf]
    %v2058 = vld [vmem:[%s2049 + $0x20] sm:$0xf]
    %v2059 = vld [vmem:[%s2049 + $0x24] sm:$0xf]
    %v2070 = vunpack.c.l.b16 %v2050
    %v2071 = vunpack.c.l.b16 %v2051
    %v2072 = vunpack.c.l.b16 %v2052
    %v2073 = vunpack.c.l.b16 %v2053
    %v2074 = vunpack.c.l.b16 %v2054
    %v2075 = vunpack.c.l.b16 %v2055
    %v2076 = vunpack.c.l.b16 %v2056
    %v2077 = vunpack.c.l.b16 %v2057
    %v2078 = vunpack.c.l.b16 %v2058
    %v2079 = vunpack.c.l.b16 %v2059
    %v2080 = vpack.c.b16 %v2071, %v2070
    %v2081 = vpack.c.b16 %v2073, %v2072
    %v2082 = vpack.c.b16 %v2075, %v2074
    %v2083 = vpack.c.b16 %v2077, %v2076
    %v2084 = vpack.c.b16 %v2079, %v2078
    %v2091 = vsel %vm2030, %v2048, 0
    %2093 = vmatprep.subr.bf16.mxu0 0
    %2094 = vmatpush1.bf16.msra.mxu0 %v2080
    %2095 = vmatprep.subr.bf16.mxu0 0
    %2096 = vmatpush1.bf16.msra.mxu0 %v2081
    %2097 = vmatprep.subr.bf16.mxu0 0
    %2098 = vmatpush1.bf16.msra.mxu0 %v2082
    %2099 = vmatprep.subr.bf16.mxu0 0
    %2100 = vmatpush1.bf16.msra.mxu0 %v2083
    %2101 = vmatprep.subr.bf16.mxu0 0
    %2102 = vmatpush1.bf16.msra.mxu0 %v2084
    %2103 = vmatprep.subr.bf16.mxu0 0
    %2104 = vmatpush1.bf16.msra.mxu0 0
    %2105 = vmatprep.subr.bf16.mxu0 0
    %2106 = vmatpush1.bf16.msra.mxu0 0
    %2107 = vmatprep.subr.bf16.mxu0 0
    %2108 = vmatpush1.bf16.msra.mxu0 0
    %2109 = vmatprep.subr.bf16.mxu0 0
    %2110 = vmatpush1.bf16.msra.mxu0 0
    %2111 = vmatprep.subr.bf16.mxu0 0
    %2112 = vmatpush1.bf16.msra.mxu0 0
    %2113 = vmatprep.subr.bf16.mxu0 0
    %2114 = vmatpush1.bf16.msra.mxu0 0
    %2115 = vmatprep.subr.bf16.mxu0 0
    %2116 = vmatpush1.bf16.msra.mxu0 0
    %2117 = vmatprep.subr.bf16.mxu0 0
    %2118 = vmatpush1.bf16.msra.mxu0 0
    %2119 = vmatprep.subr.bf16.mxu0 0
    %2120 = vmatpush1.bf16.msra.mxu0 0
    %2121 = vmatprep.subr.bf16.mxu0 0
    %2122 = vmatpush1.bf16.msra.mxu0 0
    %2123 = vmatprep.subr.bf16.mxu0 0
    %2124 = vmatpush1.bf16.msra.mxu0 0
    %2125 = vmatprep.mubr.bf16.mxu0 0
    %2126 = vmatmul.mubr.bf16.gmra.mrb[0].mxu0 %v2091
    %v2127 = vpop.f32.mrb[0].mxu0
    %v2128 = vadd.f32 0.0, %v2127
    %v2129 = vpop.f32.mrb[0].mxu0
    %v2130 = vpop.f32.mrb[0].mxu0
    %v2131 = vpop.f32.mrb[0].mxu0
    %2132 = vdwg.mxu0
    %v2143 = vunpack.c.l.b16 %v2036
    %v2144 = vunpack.c.l.b16 %v2037
    %v2145 = vunpack.c.l.b16 %v2038
    %v2146 = vunpack.c.l.b16 %v2039
    %v2147 = vunpack.c.l.b16 %v2040
    %v2148 = vunpack.c.l.b16 %v2041
    %v2149 = vunpack.c.l.b16 %v2042
    %v2150 = vunpack.c.l.b16 %v2043
    %v2151 = vunpack.c.l.b16 %v2044
    %v2152 = vunpack.c.l.b16 %v2045
    %v2153 = vpack.c.b16 %v2144, %v2143
    %v2154 = vpack.c.b16 %v2146, %v2145
    %v2155 = vpack.c.b16 %v2148, %v2147
    %v2156 = vpack.c.b16 %v2150, %v2149
    %v2157 = vpack.c.b16 %v2152, %v2151
    %v2164 = vsel %vm2030, %v2035, 0
    %2166 = vmatprep.subr.bf16.mxu0 0
    %2167 = vmatpush1.bf16.msra.mxu0 %v2153
    %2168 = vmatprep.subr.bf16.mxu0 0
    %2169 = vmatpush1.bf16.msra.mxu0 %v2154
    %2170 = vmatprep.subr.bf16.mxu0 0
    %2171 = vmatpush1.bf16.msra.mxu0 %v2155
    %2172 = vmatprep.subr.bf16.mxu0 0
    %2173 = vmatpush1.bf16.msra.mxu0 %v2156
    %2174 = vmatprep.subr.bf16.mxu0 0
    %2175 = vmatpush1.bf16.msra.mxu0 %v2157
    %2176 = vmatprep.subr.bf16.mxu0 0
    %2177 = vmatpush1.bf16.msra.mxu0 0
    %2178 = vmatprep.subr.bf16.mxu0 0
    %2179 = vmatpush1.bf16.msra.mxu0 0
    %2180 = vmatprep.subr.bf16.mxu0 0
    %2181 = vmatpush1.bf16.msra.mxu0 0
    %2182 = vmatprep.subr.bf16.mxu0 0
    %2183 = vmatpush1.bf16.msra.mxu0 0
    %2184 = vmatprep.subr.bf16.mxu0 0
    %2185 = vmatpush1.bf16.msra.mxu0 0
    %2186 = vmatprep.subr.bf16.mxu0 0
    %2187 = vmatpush1.bf16.msra.mxu0 0
    %2188 = vmatprep.subr.bf16.mxu0 0
    %2189 = vmatpush1.bf16.msra.mxu0 0
    %2190 = vmatprep.subr.bf16.mxu0 0
    %2191 = vmatpush1.bf16.msra.mxu0 0
    %2192 = vmatprep.subr.bf16.mxu0 0
    %2193 = vmatpush1.bf16.msra.mxu0 0
    %2194 = vmatprep.subr.bf16.mxu0 0
    %2195 = vmatpush1.bf16.msra.mxu0 0
    %2196 = vmatprep.subr.bf16.mxu0 0
    %2197 = vmatpush1.bf16.msra.mxu0 0
    %2198 = vmatprep.mubr.bf16.mxu0 0
    %2199 = vmatmul.mubr.bf16.gmra.mrb[0].mxu0 %v2164
    %v2200 = vpop.f32.mrb[0].mxu0
    %v2201 = vadd.f32 %v2128, %v2200
    %v2202 = vpop.f32.mrb[0].mxu0
    %v2203 = vpop.f32.mrb[0].mxu0
    %v2204 = vpop.f32.mrb[0].mxu0
    %2205 = vdwg.mxu0
    %s2206 = scalar_lea.vmem [#allocation3], 2
    %v2207 = vld [vmem:[%s2206] ss:$8 sm:$0x3]
    %v2208 = vpack.c.bf16 %v2207, %v2207
    %s2209 = scalar_lea.vmem [#allocation4], 80
    %v2210 = vld [vmem:[%s2209] sm:$0xf]
    %v2211 = vld [vmem:[%s2209 + $0x4] sm:$0xf]
    %v2212 = vld [vmem:[%s2209 + $0x8] sm:$0xf]
    %v2213 = vld [vmem:[%s2209 + $0xc] sm:$0xf]
    %v2214 = vld [vmem:[%s2209 + $0x10] sm:$0xf]
    %v2215 = vld [vmem:[%s2209 + $0x14] sm:$0xf]
    %v2216 = vld [vmem:[%s2209 + $0x18] sm:$0xf]
    %v2217 = vld [vmem:[%s2209 + $0x1c] sm:$0xf]
    %v2218 = vld [vmem:[%s2209 + $0x20] sm:$0xf]
    %v2219 = vld [vmem:[%s2209 + $0x24] sm:$0xf]
    %v2230 = vunpack.c.l.b16 %v2210
    %v2231 = vunpack.c.l.b16 %v2211
    %v2232 = vunpack.c.l.b16 %v2212
    %v2233 = vunpack.c.l.b16 %v2213
    %v2234 = vunpack.c.l.b16 %v2214
    %v2235 = vunpack.c.l.b16 %v2215
    %v2236 = vunpack.c.l.b16 %v2216
    %v2237 = vunpack.c.l.b16 %v2217
    %v2238 = vunpack.c.l.b16 %v2218
    %v2239 = vunpack.c.l.b16 %v2219
    %v2240 = vpack.c.b16 %v2231, %v2230
    %v2241 = vpack.c.b16 %v2233, %v2232
    %v2242 = vpack.c.b16 %v2235, %v2234
    %v2243 = vpack.c.b16 %v2237, %v2236
    %v2244 = vpack.c.b16 %v2239, %v2238
    %v2251 = vsel %vm2030, %v2208, 0
    %2253 = vmatprep.subr.bf16.mxu0 0
    %2254 = vmatpush1.bf16.msra.mxu0 %v2240
    %2255 = vmatprep.subr.bf16.mxu0 0
    %2256 = vmatpush1.bf16.msra.mxu0 %v2241
    %2257 = vmatprep.subr.bf16.mxu0 0
    %2258 = vmatpush1.bf16.msra.mxu0 %v2242
    %2259 = vmatprep.subr.bf16.mxu0 0
    %2260 = vmatpush1.bf16.msra.mxu0 %v2243
    %2261 = vmatprep.subr.bf16.mxu0 0
    %2262 = vmatpush1.bf16.msra.mxu0 %v2244
    %2263 = vmatprep.subr.bf16.mxu0 0
    %2264 = vmatpush1.bf16.msra.mxu0 0
    %2265 = vmatprep.subr.bf16.mxu0 0
    %2266 = vmatpush1.bf16.msra.mxu0 0
    %2267 = vmatprep.subr.bf16.mxu0 0
    %2268 = vmatpush1.bf16.msra.mxu0 0
    %2269 = vmatprep.subr.bf16.mxu0 0
    %2270 = vmatpush1.bf16.msra.mxu0 0
    %2271 = vmatprep.subr.bf16.mxu0 0
    %2272 = vmatpush1.bf16.msra.mxu0 0
    %2273 = vmatprep.subr.bf16.mxu0 0
    %2274 = vmatpush1.bf16.msra.mxu0 0
    %2275 = vmatprep.subr.bf16.mxu0 0
    %2276 = vmatpush1.bf16.msra.mxu0 0
    %2277 = vmatprep.subr.bf16.mxu0 0
    %2278 = vmatpush1.bf16.msra.mxu0 0
    %2279 = vmatprep.subr.bf16.mxu0 0
    %2280 = vmatpush1.bf16.msra.mxu0 0
    %2281 = vmatprep.subr.bf16.mxu0 0
    %2282 = vmatpush1.bf16.msra.mxu0 0
    %2283 = vmatprep.subr.bf16.mxu0 0
    %2284 = vmatpush1.bf16.msra.mxu0 0
    %2285 = vmatprep.mubr.bf16.mxu0 0
    %2286 = vmatmul.mubr.bf16.gmra.mrb[0].mxu0 %v2251
    %v2287 = vpop.f32.mrb[0].mxu0
    %v2288 = vadd.f32 0.0, %v2287
    %v2289 = vpop.f32.mrb[0].mxu0
    %v2290 = vpop.f32.mrb[0].mxu0
    %v2291 = vpop.f32.mrb[0].mxu0
    %2292 = vdwg.mxu0
    %v2293 = vadd.f32 %v2201, %v2288
    %s2294 = scalar_lea.vmem [#allocation3], 3
    %v2295 = vld [vmem:[%s2294] ss:$8 sm:$0x3]
    %v2296 = vpack.c.bf16 %v2295, %v2295
    %s2297 = scalar_lea.vmem [#allocation4], 120
    %v2298 = vld [vmem:[%s2297] sm:$0xf]
    %v2299 = vld [vmem:[%s2297 + $0x4] sm:$0xf]
    %v2300 = vld [vmem:[%s2297 + $0x8] sm:$0xf]
    %v2301 = vld [vmem:[%s2297 + $0xc] sm:$0xf]
    %v2302 = vld [vmem:[%s2297 + $0x10] sm:$0xf]
    %v2303 = vld [vmem:[%s2297 + $0x14] sm:$0xf]
    %v2304 = vld [vmem:[%s2297 + $0x18] sm:$0xf]
    %v2305 = vld [vmem:[%s2297 + $0x1c] sm:$0xf]
    %v2306 = vld [vmem:[%s2297 + $0x20] sm:$0xf]
    %v2307 = vld [vmem:[%s2297 + $0x24] sm:$0xf]
    %v2318 = vunpack.c.l.b16 %v2298
    %v2319 = vunpack.c.l.b16 %v2299
    %v2320 = vunpack.c.l.b16 %v2300
    %v2321 = vunpack.c.l.b16 %v2301
    %v2322 = vunpack.c.l.b16 %v2302
    %v2323 = vunpack.c.l.b16 %v2303
    %v2324 = vunpack.c.l.b16 %v2304
    %v2325 = vunpack.c.l.b16 %v2305
    %v2326 = vunpack.c.l.b16 %v2306
    %v2327 = vunpack.c.l.b16 %v2307
    %v2328 = vpack.c.b16 %v2319, %v2318
    %v2329 = vpack.c.b16 %v2321, %v2320
    %v2330 = vpack.c.b16 %v2323, %v2322
    %v2331 = vpack.c.b16 %v2325, %v2324
    %v2332 = vpack.c.b16 %v2327, %v2326
    %v2339 = vsel %vm2030, %v2296, 0
    %2341 = vmatprep.subr.bf16.mxu0 0
    %2342 = vmatpush1.bf16.msra.mxu0 %v2328
    %2343 = vmatprep.subr.bf16.mxu0 0
    %2344 = vmatpush1.bf16.msra.mxu0 %v2329
    %2345 = vmatprep.subr.bf16.mxu0 0
    %2346 = vmatpush1.bf16.msra.mxu0 %v2330
    %2347 = vmatprep.subr.bf16.mxu0 0
    %2348 = vmatpush1.bf16.msra.mxu0 %v2331
    %2349 = vmatprep.subr.bf16.mxu0 0
    %2350 = vmatpush1.bf16.msra.mxu0 %v2332
    %2351 = vmatprep.subr.bf16.mxu0 0
    %2352 = vmatpush1.bf16.msra.mxu0 0
    %2353 = vmatprep.subr.bf16.mxu0 0
    %2354 = vmatpush1.bf16.msra.mxu0 0
    %2355 = vmatprep.subr.bf16.mxu0 0
    %2356 = vmatpush1.bf16.msra.mxu0 0
    %2357 = vmatprep.subr.bf16.mxu0 0
    %2358 = vmatpush1.bf16.msra.mxu0 0
    %2359 = vmatprep.subr.bf16.mxu0 0
    %2360 = vmatpush1.bf16.msra.mxu0 0
    %2361 = vmatprep.subr.bf16.mxu0 0
    %2362 = vmatpush1.bf16.msra.mxu0 0
    %2363 = vmatprep.subr.bf16.mxu0 0
    %2364 = vmatpush1.bf16.msra.mxu0 0
    %2365 = vmatprep.subr.bf16.mxu0 0
    %2366 = vmatpush1.bf16.msra.mxu0 0
    %2367 = vmatprep.subr.bf16.mxu0 0
    %2368 = vmatpush1.bf16.msra.mxu0 0
    %2369 = vmatprep.subr.bf16.mxu0 0
    %2370 = vmatpush1.bf16.msra.mxu0 0
    %2371 = vmatprep.subr.bf16.mxu0 0
    %2372 = vmatpush1.bf16.msra.mxu0 0
    %2373 = vmatprep.mubr.bf16.mxu0 0
    %2374 = vmatmul.mubr.bf16.gmra.mrb[0].mxu0 %v2339
    %v2375 = vpop.f32.mrb[0].mxu0
    %v2376 = vadd.f32 0.0, %v2375
    %v2377 = vpop.f32.mrb[0].mxu0
    %v2378 = vpop.f32.mrb[0].mxu0
    %v2379 = vpop.f32.mrb[0].mxu0
    %2380 = vdwg.mxu0
    %v2381 = vadd.f32 %v2293, %v2376
    %s2382 = scalar_lea.vmem [#allocation3], 4
    %v2383 = vld [vmem:[%s2382] ss:$8 sm:$0x3]
    %v2384 = vpack.c.bf16 %v2383, %v2383
    %s2385 = scalar_lea.vmem [#allocation4], 160
    %v2386 = vld [vmem:[%s2385] sm:$0xf]
    %v2387 = vld [vmem:[%s2385 + $0x4] sm:$0xf]
    %v2388 = vld [vmem:[%s2385 + $0x8] sm:$0xf]
    %v2389 = vld [vmem:[%s2385 + $0xc] sm:$0xf]
    %v2390 = vld [vmem:[%s2385 + $0x10] sm:$0xf]
    %v2391 = vld [vmem:[%s2385 + $0x14] sm:$0xf]
    %v2392 = vld [vmem:[%s2385 + $0x18] sm:$0xf]
    %v2393 = vld [vmem:[%s2385 + $0x1c] sm:$0xf]
    %v2394 = vld [vmem:[%s2385 + $0x20] sm:$0xf]
    %v2395 = vld [vmem:[%s2385 + $0x24] sm:$0xf]
    %v2406 = vunpack.c.l.b16 %v2386
    %v2407 = vunpack.c.l.b16 %v2387
    %v2408 = vunpack.c.l.b16 %v2388
    %v2409 = vunpack.c.l.b16 %v2389
    %v2410 = vunpack.c.l.b16 %v2390
    %v2411 = vunpack.c.l.b16 %v2391
    %v2412 = vunpack.c.l.b16 %v2392
    %v2413 = vunpack.c.l.b16 %v2393
    %v2414 = vunpack.c.l.b16 %v2394
    %v2415 = vunpack.c.l.b16 %v2395
    %v2416 = vpack.c.b16 %v2407, %v2406
    %v2417 = vpack.c.b16 %v2409, %v2408
    %v2418 = vpack.c.b16 %v2411, %v2410
    %v2419 = vpack.c.b16 %v2413, %v2412
    %v2420 = vpack.c.b16 %v2415, %v2414
    %v2427 = vsel %vm2030, %v2384, 0
    %2429 = vmatprep.subr.bf16.mxu0 0
    %2430 = vmatpush1.bf16.msra.mxu0 %v2416
    %2431 = vmatprep.subr.bf16.mxu0 0
    %2432 = vmatpush1.bf16.msra.mxu0 %v2417
    %2433 = vmatprep.subr.bf16.mxu0 0
    %2434 = vmatpush1.bf16.msra.mxu0 %v2418
    %2435 = vmatprep.subr.bf16.mxu0 0
    %2436 = vmatpush1.bf16.msra.mxu0 %v2419
    %2437 = vmatprep.subr.bf16.mxu0 0
    %2438 = vmatpush1.bf16.msra.mxu0 %v2420
    %2439 = vmatprep.subr.bf16.mxu0 0
    %2440 = vmatpush1.bf16.msra.mxu0 0
    %2441 = vmatprep.subr.bf16.mxu0 0
    %2442 = vmatpush1.bf16.msra.mxu0 0
    %2443 = vmatprep.subr.bf16.mxu0 0
    %2444 = vmatpush1.bf16.msra.mxu0 0
    %2445 = vmatprep.subr.bf16.mxu0 0
    %2446 = vmatpush1.bf16.msra.mxu0 0
    %2447 = vmatprep.subr.bf16.mxu0 0
    %2448 = vmatpush1.bf16.msra.mxu0 0
    %2449 = vmatprep.subr.bf16.mxu0 0
    %2450 = vmatpush1.bf16.msra.mxu0 0
    %2451 = vmatprep.subr.bf16.mxu0 0
    %2452 = vmatpush1.bf16.msra.mxu0 0
    %2453 = vmatprep.subr.bf16.mxu0 0
    %2454 = vmatpush1.bf16.msra.mxu0 0
    %2455 = vmatprep.subr.bf16.mxu0 0
    %2456 = vmatpush1.bf16.msra.mxu0 0
    %2457 = vmatprep.subr.bf16.mxu0 0
    %2458 = vmatpush1.bf16.msra.mxu0 0
    %2459 = vmatprep.subr.bf16.mxu0 0
    %2460 = vmatpush1.bf16.msra.mxu0 0
    %2461 = vmatprep.mubr.bf16.mxu0 0
    %2462 = vmatmul.mubr.bf16.gmra.mrb[0].mxu0 %v2427
    %v2463 = vpop.f32.mrb[0].mxu0
    %v2464 = vadd.f32 0.0, %v2463
    %v2465 = vpop.f32.mrb[0].mxu0
    %v2466 = vpop.f32.mrb[0].mxu0
    %v2467 = vpop.f32.mrb[0].mxu0
    %2468 = vdwg.mxu0
    %v2469 = vadd.f32 %v2381, %v2464
    %v2470 = vld [vmem:[%s6] sm:$0x1]
    %v2472 = vlaneseq
    %v2473 = vshrl.u32 %v2472, 7
    %v2474 = vsub.s32 0, %v2473
    %v2475 = vrot.slane %v2470, %v2474
    %v2477 = vadd.f32 %v2469, %v2475
    %v2478 = vmax.f32 %v2477, 0.0
    %v2479 = vpack.c.bf16 %v2478, %v2478
    %v2480 = vld [vmem:[%s7] sm:$0xf]
    %v2481 = vld [vmem:[%s7 + $0x4] sm:$0xf]
    %v2482 = vld [vmem:[%s7 + $0x8] sm:$0xf]
    %v2483 = vld [vmem:[%s7 + $0xc] sm:$0xf]
    %v2484 = vld [vmem:[%s7 + $0x10] sm:$0xf]
    %v2485 = vld [vmem:[%s7 + $0x14] sm:$0xf]
    %v2486 = vld [vmem:[%s7 + $0x18] sm:$0xf]
    %v2487 = vld [vmem:[%s7 + $0x1c] sm:$0xf]
    %v2488 = vld [vmem:[%s7 + $0x20] sm:$0xf]
    %v2489 = vld [vmem:[%s7 + $0x24] sm:$0xf]
    %v2490 = vld [vmem:[%s7 + $0x28] sm:$0xf]
    %v2491 = vld [vmem:[%s7 + $0x2c] sm:$0xf]
    %v2492 = vld [vmem:[%s7 + $0x30] sm:$0xf]
    %v2493 = vld [vmem:[%s7 + $0x34] sm:$0xf]
    %v2494 = vld [vmem:[%s7 + $0x38] sm:$0xf]
    %v2495 = vld [vmem:[%s8] sm:$0x1]
    %v2497 = vlaneseq
    %v2498 = vshrl.u32 %v2497, 7
    %v2499 = vsub.s32 0, %v2498
    %v2500 = vrot.slane %v2495, %v2499
    %v2517 = vunpack.c.l.b16 %v2480
    %v2518 = vunpack.c.l.b16 %v2481
    %v2519 = vunpack.c.l.b16 %v2482
    %v2520 = vunpack.c.l.b16 %v2483
    %v2521 = vunpack.c.l.b16 %v2484
    %v2522 = vunpack.c.l.b16 %v2485
    %v2523 = vunpack.c.l.b16 %v2486
    %v2524 = vunpack.c.l.b16 %v2487
    %v2525 = vunpack.c.l.b16 %v2488
    %v2526 = vunpack.c.l.b16 %v2489
    %v2527 = vunpack.c.l.b16 %v2490
    %v2528 = vunpack.c.l.b16 %v2491
    %v2529 = vunpack.c.l.b16 %v2492
    %v2530 = vunpack.c.l.b16 %v2493
    %v2531 = vunpack.c.l.b16 %v2494
    %v2532 = vpack.c.b16 %v2518, %v2517
    %v2533 = vpack.c.b16 %v2520, %v2519
    %v2534 = vpack.c.b16 %v2522, %v2521
    %v2535 = vpack.c.b16 %v2524, %v2523
    %v2536 = vpack.c.b16 %v2526, %v2525
    %v2537 = vpack.c.b16 %v2528, %v2527
    %v2538 = vpack.c.b16 %v2530, %v2529
    %v2539 = vpack.c.b16 %v2531, %v2531
    %vm2547 = vcmask 982016
    %v2549 = vsel %vm2547, %v2479, 0
    %vm2551 = vcmask 1043456
    %v2553 = vsel %vm2551, %v2539, 0
    %2555 = vmatprep.subr.bf16.mxu0 0
    %2556 = vmatpush1.bf16.msra.mxu0 %v2532
    %2557 = vmatprep.subr.bf16.mxu0 0
    %2558 = vmatpush1.bf16.msra.mxu0 %v2533
    %2559 = vmatprep.subr.bf16.mxu0 0
    %2560 = vmatpush1.bf16.msra.mxu0 %v2534
    %2561 = vmatprep.subr.bf16.mxu0 0
    %2562 = vmatpush1.bf16.msra.mxu0 %v2535
    %2563 = vmatprep.subr.bf16.mxu0 0
    %2564 = vmatpush1.bf16.msra.mxu0 %v2536
    %2565 = vmatprep.subr.bf16.mxu0 0
    %2566 = vmatpush1.bf16.msra.mxu0 %v2537
    %2567 = vmatprep.subr.bf16.mxu0 0
    %2568 = vmatpush1.bf16.msra.mxu0 %v2538
    %2569 = vmatprep.subr.bf16.mxu0 0
    %2570 = vmatpush1.bf16.msra.mxu0 %v2553
    %2571 = vmatprep.subr.bf16.mxu0 0
    %2572 = vmatpush1.bf16.msra.mxu0 0
    %2573 = vmatprep.subr.bf16.mxu0 0
    %2574 = vmatpush1.bf16.msra.mxu0 0
    %2575 = vmatprep.subr.bf16.mxu0 0
    %2576 = vmatpush1.bf16.msra.mxu0 0
    %2577 = vmatprep.subr.bf16.mxu0 0
    %2578 = vmatpush1.bf16.msra.mxu0 0
    %2579 = vmatprep.subr.bf16.mxu0 0
    %2580 = vmatpush1.bf16.msra.mxu0 0
    %2581 = vmatprep.subr.bf16.mxu0 0
    %2582 = vmatpush1.bf16.msra.mxu0 0
    %2583 = vmatprep.subr.bf16.mxu0 0
    %2584 = vmatpush1.bf16.msra.mxu0 0
    %2585 = vmatprep.subr.bf16.mxu0 0
    %2586 = vmatpush1.bf16.msra.mxu0 0
    %2587 = vmatprep.mubr.bf16.mxu0 0
    %2588 = vmatmul.mubr.bf16.gmra.mrb[0].mxu0 %v2549
    %v2589 = vpop.f32.mrb[0].mxu0
    %v2590 = vadd.f32 %v2500, %v2589
    %v2591 = vpop.f32.mrb[0].mxu0
    %v2592 = vpop.f32.mrb[0].mxu0
    %v2593 = vpop.f32.mrb[0].mxu0
    %2594 = vdwg.mxu0
    %v2595 = vmax.f32 %v2590, 0.0
    %v2596 = vpack.c.bf16 %v2595, %v2595
    %v2597 = vld [vmem:[%s9] sm:$0xf]
    %v2598 = vld [vmem:[%s9 + $0x4] sm:$0xf]
    %v2599 = vld [vmem:[%s9 + $0x8] sm:$0xf]
    %v2600 = vld [vmem:[%s9 + $0xc] sm:$0xf]
    %v2601 = vld [vmem:[%s9 + $0x10] sm:$0xf]
    %v2602 = vld [vmem:[%s9 + $0x14] sm:$0xf]
    %v2603 = vld [vmem:[%s9 + $0x18] sm:$0xf]
    %v2604 = vld [vmem:[%s9 + $0x1c] sm:$0xf]
    %v2605 = vld [vmem:[%s9 + $0x20] sm:$0xf]
    %v2606 = vld [vmem:[%s9 + $0x24] sm:$0xf]
    %v2607 = vld [vmem:[%s9 + $0x28] sm:$0x3]
    %v2608 = vld [vmem:[%s10] sm:$0x1]
    %v2610 = vlaneseq
    %v2611 = vshrl.u32 %v2610, 7
    %v2612 = vsub.s32 0, %v2611
    %v2613 = vrot.slane %v2608, %v2612
    %v2626 = vunpack.c.l.b16 %v2597
    %v2627 = vunpack.c.l.b16 %v2598
    %v2628 = vunpack.c.l.b16 %v2599
    %v2629 = vunpack.c.l.b16 %v2600
    %v2630 = vunpack.c.l.b16 %v2601
    %v2631 = vunpack.c.l.b16 %v2602
    %v2632 = vunpack.c.l.b16 %v2603
    %v2633 = vunpack.c.l.b16 %v2604
    %v2634 = vunpack.c.l.b16 %v2605
    %v2635 = vunpack.c.l.b16 %v2606
    %v2636 = vunpack.c.l.b16 %v2607
    %v2637 = vpack.c.b16 %v2627, %v2626
    %v2638 = vpack.c.b16 %v2629, %v2628
    %v2639 = vpack.c.b16 %v2631, %v2630
    %v2640 = vpack.c.b16 %v2633, %v2632
    %v2641 = vpack.c.b16 %v2635, %v2634
    %v2642 = vpack.c.b16 %v2636, %v2636
    %v2649 = vsel %vm1132, %v2596, 0
    %v2652 = vsel %vm1233, %v2642, 0
    %2654 = vmatprep.subr.bf16.mxu0 0
    %2655 = vmatpush1.bf16.msra.mxu0 %v2637
    %2656 = vmatprep.subr.bf16.mxu0 0
    %2657 = vmatpush1.bf16.msra.mxu0 %v2638
    %2658 = vmatprep.subr.bf16.mxu0 0
    %2659 = vmatpush1.bf16.msra.mxu0 %v2639
    %2660 = vmatprep.subr.bf16.mxu0 0
    %2661 = vmatpush1.bf16.msra.mxu0 %v2640
    %2662 = vmatprep.subr.bf16.mxu0 0
    %2663 = vmatpush1.bf16.msra.mxu0 %v2641
    %2664 = vmatprep.subr.bf16.mxu0 0
    %2665 = vmatpush1.bf16.msra.mxu0 %v2652
    %2666 = vmatprep.subr.bf16.mxu0 0
    %2667 = vmatpush1.bf16.msra.mxu0 0
    %2668 = vmatprep.subr.bf16.mxu0 0
    %2669 = vmatpush1.bf16.msra.mxu0 0
    %2670 = vmatprep.subr.bf16.mxu0 0
    %2671 = vmatpush1.bf16.msra.mxu0 0
    %2672 = vmatprep.subr.bf16.mxu0 0
    %2673 = vmatpush1.bf16.msra.mxu0 0
    %2674 = vmatprep.subr.bf16.mxu0 0
    %2675 = vmatpush1.bf16.msra.mxu0 0
    %2676 = vmatprep.subr.bf16.mxu0 0
    %2677 = vmatpush1.bf16.msra.mxu0 0
    %2678 = vmatprep.subr.bf16.mxu0 0
    %2679 = vmatpush1.bf16.msra.mxu0 0
    %2680 = vmatprep.subr.bf16.mxu0 0
    %2681 = vmatpush1.bf16.msra.mxu0 0
    %2682 = vmatprep.subr.bf16.mxu0 0
    %2683 = vmatpush1.bf16.msra.mxu0 0
    %2684 = vmatprep.subr.bf16.mxu0 0
    %2685 = vmatpush1.bf16.msra.mxu0 0
    %2686 = vmatprep.mubr.bf16.mxu0 0
    %2687 = vmatmul.mubr.bf16.gmra.mrb[0].mxu0 %v2649
    %v2688 = vpop.f32.mrb[0].mxu0
    %v2689 = vadd.f32 %v2613, %v2688
    %v2690 = vpop.f32.mrb[0].mxu0
    %v2691 = vpop.f32.mrb[0].mxu0
    %v2692 = vpop.f32.mrb[0].mxu0
    %2693 = vdwg.mxu0
    %vm2694 = vcmask 74752
    %2695 = vst.msk [vmem:[#allocation7] sm:$0x3] %vm2694, %v2689
    // Predicated region
    $region50: #{net_forward.1} parent=1 // pred_check
      _
    $region51: #{net_forward.1} parent=1 // pred_check_branch
      %2697 = sbr.rel (0) target = $region53
    $region52: #{net_forward.1} parent=1 // pred_region
      %s2699 = ssub.s32 32, 32
      %2700 = vsyncadd [#allocation6], %s2699
      %s2702 = sshll.u32 [#allocation7], 4
      %s2703 = int_to_ptr.vmem [resolvable:$true] %s2702
      %2705 = dma.vmem_to_hbm [thread:$0]  %s2703, 32, %s11, [#allocation6]
    $region53: #{net_forward.1} parent=1 // pred_fallthru
      _
    // Predicated region
    $region54: #{net_forward.1} parent=1 // pred_check
      _
    $region55: #{net_forward.1} parent=1 // pred_check_branch
      %2707 = sbr.rel (0) target = $region57
    $region56: #{net_forward.1} parent=1 // pred_region
      %2708 = dma.done [#allocation6], 32
    $region57: #{net_forward.1} parent=1 // pred_fallthru
      _
    %2709 = vsyncpa [#allocation5], 1
    %2710 = vsyncpa [#allocation6], 1

</llo_original>
